<compile_context>
chip_gen: v6e
topology: v6e:2x2x1
jax: 0.10.0
libtpu: 0.0.40
codegen_flags: <defaults>
</compile_context>

<pallas_src>
import functools

import jax
import jax.numpy as jnp
from jax.experimental import pallas as pl
from jax.experimental.pallas import tpu as pltpu


WEIGHT_DTYPE = jnp.bfloat16   # matmul weights as stored in HBM
ACT_DTYPE = jnp.bfloat16      # activations handed between kernels


# ---------------------------------------------------------------------------
# Generation-aware VMEM limits / tile targets
# ---------------------------------------------------------------------------
@functools.lru_cache(maxsize=None)
def _vmem_capacity_bytes():
    cap = 128 * 1024 * 1024
    try:
        info = pltpu.get_tpu_info()
        cap = int(getattr(info, "vmem_capacity_bytes", cap)) or cap
    except Exception:
        pass
    return cap


@functools.lru_cache(maxsize=None)
def _vmem_limit_bytes():
    # ~3/4 of physical VMEM: ~96 MiB on v5e/v6e (128 MiB), ~48 MiB on v7x (64 MiB).
    return min(100 * 1024 * 1024, (_vmem_capacity_bytes() * 3) // 4)


def _small_vmem():
    return _vmem_capacity_bytes() <= 64 * 1024 * 1024


def _compiler_params(dimension_semantics):
    return pltpu.CompilerParams(dimension_semantics=dimension_semantics,
                                vmem_limit_bytes=_vmem_limit_bytes())


def _tile(full, target, base):
    """Largest multiple of `base` that evenly divides `full` and is <= target.

    Falls back to `full` (single block) when no such divisor exists, keeping
    the (8, 128) BlockSpec constraint satisfied (block dim == full array dim).
    NOTE: real-model lane dims should be 128-aligned (e.g. pad GPT-2's 50257
    vocab to 50304) to avoid a single huge fallback block for the head.
    """
    if full <= target:
        return full
    if full % base != 0:
        return full
    t = (min(target, full) // base) * base
    while t >= base:
        if full % t == 0:
            return t
        t -= base
    return full


# ---------------------------------------------------------------------------
# In-kernel math helpers (always f32)
# ---------------------------------------------------------------------------
def _layernorm(x, w, b, eps=1e-5):
    mu = jnp.mean(x, axis=-1, keepdims=True)
    var = jnp.mean((x - mu) ** 2, axis=-1, keepdims=True)
    return (x - mu) * jax.lax.rsqrt(var + eps) * w + b


def _gelu_exact(x):
    # PyTorch F.gelu default (approximate='none'): 0.5*x*(1+erf(x/sqrt(2)))
    return 0.5 * x * (1.0 + jax.lax.erf(x * (1.0 / jnp.sqrt(jnp.float32(2.0)))))


# ---------------------------------------------------------------------------
# Kernel: K-tiled matmul + bias        y = x @ W + b   (W stored (K, N), bf16)
# grid = (M//tm, N//tn, K//tk), f32 accumulator, reduction axis last.
# ---------------------------------------------------------------------------
def matmul_bias_kernel(x_ref, w_ref, b_ref, o_ref, acc_ref):
    @pl.when(pl.program_id(2) == 0)
    def _():
        acc_ref[...] = jnp.zeros_like(acc_ref)

    acc_ref[...] += jnp.dot(x_ref[...], w_ref[...],
                            preferred_element_type=jnp.float32)

    @pl.when(pl.program_id(2) == pl.num_programs(2) - 1)
    def _():
        o_ref[...] = (acc_ref[...] + b_ref[...]).astype(o_ref.dtype)


def matmul_bias(x, w, b, *, tm=256, tn=768, tk=None, out_dtype=ACT_DTYPE):
    M, K = x.shape
    _, N = w.shape
    if tk is None:
        tk = 512 if _small_vmem() else 1024
    tm = _tile(M, tm, 8)
    tn = _tile(N, tn, 128)
    tk = _tile(K, tk, 128)
    grid = (M // tm, N // tn, K // tk)
    return pl.pallas_call(
        matmul_bias_kernel,
        out_shape=jax.ShapeDtypeStruct((M, N), out_dtype),
        grid=grid,
        in_specs=[
            pl.BlockSpec((tm, tk), lambda i, j, k: (i, k)),   # x tile
            pl.BlockSpec((tk, tn), lambda i, j, k: (k, j)),   # weight tile
            pl.BlockSpec((1, tn), lambda i, j, k: (0, j)),    # bias tile
        ],
        out_specs=pl.BlockSpec((tm, tn), lambda i, j, k: (i, j)),
        scratch_shapes=[pltpu.VMEM((tm, tn), jnp.float32)],
        compiler_params=_compiler_params(("parallel", "parallel", "arbitrary")),
    )(x, w, b)


# ---------------------------------------------------------------------------
# Kernel: no-bias matmul (vocab head) — no dead zero-bias DMA, lane-dense tn.
# ---------------------------------------------------------------------------
def matmul_nobias_kernel(x_ref, w_ref, o_ref, acc_ref):
    @pl.when(pl.program_id(2) == 0)
    def _():
        acc_ref[...] = jnp.zeros_like(acc_ref)

    acc_ref[...] += jnp.dot(x_ref[...], w_ref[...],
                            preferred_element_type=jnp.float32)

    @pl.when(pl.program_id(2) == pl.num_programs(2) - 1)
    def _():
        o_ref[...] = acc_ref[...].astype(o_ref.dtype)


def matmul_nobias(x, w, *, tm=256, tn=1024, tk=None, out_dtype=ACT_DTYPE):
    M, K = x.shape
    _, N = w.shape
    if tk is None:
        tk = 512 if _small_vmem() else 1024
    tm = _tile(M, tm, 8)
    tn = _tile(N, tn, 128)
    tk = _tile(K, tk, 128)
    grid = (M // tm, N // tn, K // tk)
    return pl.pallas_call(
        matmul_nobias_kernel,
        out_shape=jax.ShapeDtypeStruct((M, N), out_dtype),
        grid=grid,
        in_specs=[
            pl.BlockSpec((tm, tk), lambda i, j, k: (i, k)),
            pl.BlockSpec((tk, tn), lambda i, j, k: (k, j)),
        ],
        out_specs=pl.BlockSpec((tm, tn), lambda i, j, k: (i, j)),
        scratch_shapes=[pltpu.VMEM((tm, tn), jnp.float32)],
        compiler_params=_compiler_params(("parallel", "parallel", "arbitrary")),
    )(x, w)


# ---------------------------------------------------------------------------
# Kernel: matmul + bias + residual-add + LayerNorm (attention out-projection).
# N is kept whole (= model dim) so LN sees full rows; grid = (M//tm, K//tk).
# ---------------------------------------------------------------------------
def matmul_bias_res_ln_kernel(x_ref, w_ref, b_ref, res_ref, lnw_ref, lnb_ref,
                              o_ref, acc_ref):
    @pl.when(pl.program_id(1) == 0)
    def _():
        acc_ref[...] = jnp.zeros_like(acc_ref)

    acc_ref[...] += jnp.dot(x_ref[...], w_ref[...],
                            preferred_element_type=jnp.float32)

    @pl.when(pl.program_id(1) == pl.num_programs(1) - 1)
    def _():
        h = acc_ref[...] + b_ref[...] + res_ref[...].astype(jnp.float32)
        o_ref[...] = _layernorm(h, lnw_ref[...], lnb_ref[...]).astype(o_ref.dtype)


def matmul_bias_res_ln(x, w, b, res, lnw, lnb, *, tm=256, tk=None,
                       out_dtype=ACT_DTYPE):
    M, K = x.shape
    _, N = w.shape
    if tk is None:
        tk = 512 if _small_vmem() else 1024
    tm = _tile(M, tm, 8)
    tk = _tile(K, tk, 128)
    grid = (M // tm, K // tk)
    return pl.pallas_call(
        matmul_bias_res_ln_kernel,
        out_shape=jax.ShapeDtypeStruct((M, N), out_dtype),
        grid=grid,
        in_specs=[
            pl.BlockSpec((tm, tk), lambda i, k: (i, k)),   # ctx tile
            pl.BlockSpec((tk, N), lambda i, k: (k, 0)),    # wo K-tile (full N)
            pl.BlockSpec((1, N), lambda i, k: (0, 0)),     # bias
            pl.BlockSpec((tm, N), lambda i, k: (i, 0)),    # residual rows
            pl.BlockSpec((1, N), lambda i, k: (0, 0)),     # ln weight
            pl.BlockSpec((1, N), lambda i, k: (0, 0)),     # ln bias
        ],
        out_specs=pl.BlockSpec((tm, N), lambda i, k: (i, 0)),
        scratch_shapes=[pltpu.VMEM((tm, N), jnp.float32)],
        compiler_params=_compiler_params(("parallel", "arbitrary")),
    )(x, w, b, res, lnw, lnb)


# ---------------------------------------------------------------------------
# Kernel: fused FFN + residual + LayerNorm
#     out = LN( x + (gelu(x @ W1 + b1) @ W2 + b2) )
# grid = (M//tm, 4D//th); the (tm, th) intermediate is produced per tile,
# GELU'd in bf16 and immediately consumed by the linear2 accumulation.
# The FFN input x is its own residual (post-norm block structure).
# ---------------------------------------------------------------------------
def ffn_res_ln_kernel(x_ref, w1_ref, b1_ref, w2_ref, b2_ref, lnw_ref, lnb_ref,
                      o_ref, acc_ref):
    @pl.when(pl.program_id(1) == 0)
    def _():
        acc_ref[...] = jnp.zeros_like(acc_ref)

    h = jnp.dot(x_ref[...], w1_ref[...],
                preferred_element_type=jnp.float32) + b1_ref[...]
    h = _gelu_exact(h)
    acc_ref[...] += jnp.dot(h.astype(x_ref.dtype), w2_ref[...],
                            preferred_element_type=jnp.float32)

    @pl.when(pl.program_id(1) == pl.num_programs(1) - 1)
    def _():
        y = acc_ref[...] + b2_ref[...] + x_ref[...].astype(jnp.float32)
        o_ref[...] = _layernorm(y, lnw_ref[...], lnb_ref[...]).astype(o_ref.dtype)


def run_ffn(x, w1, b1, w2, b2, lnw, lnb, *, tm=None, th=None,
            out_dtype=ACT_DTYPE):
    M, D = x.shape
    H4 = w1.shape[1]
    if tm is None:
        tm = 128 if _small_vmem() else 256
    if th is None:
        th = 256 if _small_vmem() else 512
    tm = _tile(M, tm, 8)
    th = _tile(H4, th, 128)
    grid = (M // tm, H4 // th)
    return pl.pallas_call(
        ffn_res_ln_kernel,
        out_shape=jax.ShapeDtypeStruct((M, D), out_dtype),
        grid=grid,
        in_specs=[
            pl.BlockSpec((tm, D), lambda i, h: (i, 0)),    # x rows (also residual)
            pl.BlockSpec((D, th), lambda i, h: (0, h)),    # W1 column tile
            pl.BlockSpec((1, th), lambda i, h: (0, h)),    # b1 tile
            pl.BlockSpec((th, D), lambda i, h: (h, 0)),    # W2 row tile
            pl.BlockSpec((1, D), lambda i, h: (0, 0)),     # b2
            pl.BlockSpec((1, D), lambda i, h: (0, 0)),     # ln weight
            pl.BlockSpec((1, D), lambda i, h: (0, 0)),     # ln bias
        ],
        out_specs=pl.BlockSpec((tm, D), lambda i, h: (i, 0)),
        scratch_shapes=[pltpu.VMEM((tm, D), jnp.float32)],
        compiler_params=_compiler_params(("parallel", "arbitrary")),
    )(x, w1, b1, w2, b2, lnw, lnb)


# ---------------------------------------------------------------------------
# Kernel: flash attention (no mask), heads batched in the einsum.
# q/k/v arrive head-major (B, H, T, Dh).  grid = (B, T//tT, T//tKV) with the
# kv axis as the online-softmax reduction ("arbitrary", last).  Output is
# written head-major (B, H, T, Dh); head merge happens in XLA glue.
# ---------------------------------------------------------------------------
def flash_attn_kernel(q_ref, k_ref, v_ref, o_ref, m_sc, l_sc, acc_sc, *, scale):
    kv = pl.program_id(2)

    @pl.when(kv == 0)
    def _():
        m_sc[...] = jnp.full(m_sc.shape, -jnp.inf, m_sc.dtype)
        l_sc[...] = jnp.zeros_like(l_sc)
        acc_sc[...] = jnp.zeros_like(acc_sc)

    q = q_ref[0]                      # (H, tT,  Dh)
    k = k_ref[0]                      # (H, tKV, Dh)
    v = v_ref[0]                      # (H, tKV, Dh)

    s = jnp.einsum("hqd,hkd->hqk", q, k,
                   preferred_element_type=jnp.float32) * scale        # (H,tT,tKV)
    m_prev = m_sc[...]
    m_new = jnp.maximum(m_prev, jnp.max(s, axis=-1, keepdims=True))
    alpha = jnp.exp(m_prev - m_new)
    p = jnp.exp(s - m_new)
    l_sc[...] = alpha * l_sc[...] + jnp.sum(p, axis=-1, keepdims=True)
    acc_sc[...] = alpha * acc_sc[...] + jnp.einsum(
        "hqk,hkd->hqd", p.astype(v.dtype), v, preferred_element_type=jnp.float32)
    m_sc[...] = m_new

    @pl.when(kv == pl.num_programs(2) - 1)
    def _():
        inv_l = pl.reciprocal(l_sc[...], approx=True)
        o_ref[0] = (acc_sc[...] * inv_l).astype(o_ref.dtype)


def run_attention(q, k, v, *, tT=256, tKV=256, out_dtype=ACT_DTYPE):
    B, H, T, Dh = q.shape
    tT = _tile(T, tT, 8)
    tKV = _tile(T, tKV, 8)
    grid = (B, T // tT, T // tKV)
    kernel = functools.partial(flash_attn_kernel, scale=1.0 / (float(Dh) ** 0.5))
    return pl.pallas_call(
        kernel,
        out_shape=jax.ShapeDtypeStruct((B, H, T, Dh), out_dtype),
        grid=grid,
        in_specs=[
            pl.BlockSpec((1, H, tT, Dh), lambda b, qi, kv: (b, 0, qi, 0)),   # q tile
            pl.BlockSpec((1, H, tKV, Dh), lambda b, qi, kv: (b, 0, kv, 0)),  # k tile
            pl.BlockSpec((1, H, tKV, Dh), lambda b, qi, kv: (b, 0, kv, 0)),  # v tile
        ],
        out_specs=pl.BlockSpec((1, H, tT, Dh), lambda b, qi, kv: (b, 0, qi, 0)),
        scratch_shapes=[
            pltpu.VMEM((H, tT, 1), jnp.float32),    # running max
            pltpu.VMEM((H, tT, 1), jnp.float32),    # running denom
            pltpu.VMEM((H, tT, Dh), jnp.float32),   # output accumulator
        ],
        compiler_params=_compiler_params(("parallel", "parallel", "arbitrary")),
    )(q, k, v)


# ---------------------------------------------------------------------------
# Kernel: plain LayerNorm (row-tiled) — only used for the final ln_f.
# ---------------------------------------------------------------------------
def ln_kernel(x_ref, w_ref, b_ref, o_ref):
    o_ref[...] = _layernorm(x_ref[...].astype(jnp.float32),
                            w_ref[...], b_ref[...]).astype(o_ref.dtype)


def run_layernorm(x, w, b, *, tm=None, out_dtype=ACT_DTYPE):
    M, D = x.shape
    if tm is None:
        tm = 256 if _small_vmem() else 512
    tm = _tile(M, tm, 8)
    return pl.pallas_call(
        ln_kernel,
        out_shape=jax.ShapeDtypeStruct((M, D), out_dtype),
        grid=(M // tm,),
        in_specs=[
            pl.BlockSpec((tm, D), lambda i: (i, 0)),
            pl.BlockSpec((1, D), lambda i: (0, 0)),
            pl.BlockSpec((1, D), lambda i: (0, 0)),
        ],
        out_specs=pl.BlockSpec((tm, D), lambda i: (i, 0)),
        compiler_params=_compiler_params(("parallel",)),
    )(x, w, b)


# ---------------------------------------------------------------------------
# Transformer block (post-norm, norm_first=False) and full forward pass
# ---------------------------------------------------------------------------
def run_transformer_block(x2, blk, n_head, B, T):
    BT, D = x2.shape
    Dh = D // n_head

    # --- multi-head self-attention ---
    qkv = matmul_bias(x2, blk["wqkv"], blk["bqkv"])                  # (BT, 3D) bf16
    # Head split + head-major transpose in XLA once per layer (bf16 layout
    # plumbing only; the attention kernel itself is flash-tiled).
    qkv = qkv.reshape(B, T, 3, n_head, Dh).transpose(2, 0, 3, 1, 4)  # (3,B,H,T,Dh)
    ctx = run_attention(qkv[0], qkv[1], qkv[2])                      # (B,H,T,Dh)
    ctx = ctx.transpose(0, 2, 1, 3).reshape(BT, D)                   # (BT, D)

    # --- out-projection fused with residual-add + LayerNorm (norm1) ---
    x1 = matmul_bias_res_ln(ctx, blk["wo"], blk["bo"], x2,
                            blk["ln1w"], blk["ln1b"])                # (BT, D)

    # --- FFN (Linear -> GELU -> Linear) fused with residual + LayerNorm (norm2)
    return run_ffn(x1, blk["w1"], blk["b1"], blk["w2"], blk["b2"],
                   blk["ln2w"], blk["ln2b"])                         # (BT, D)


def gpt_forward(idx, params, n_head):
    B, T = idx.shape
    D = params["tok_emb"].shape[1]
    V = params["head_w"].shape[1]

    # Embedding gather + positional add (dropout = identity) in XLA glue.
    tok = jnp.take(params["tok_emb"], idx, axis=0)                   # (B, T, D)
    x = tok + params["pos_emb"][:, :T, :]                            # (B, T, D) f32
    x2 = x.reshape(B * T, D).astype(ACT_DTYPE)

    for blk in params["blocks"]:
        x2 = run_transformer_block(x2, blk, n_head, B, T)

    # Final LayerNorm + V-tiled no-bias vocab head (lane-dense, bf16 logits).
    xn = run_layernorm(x2, params["ln_f_w"], params["ln_f_b"])
    logits = matmul_nobias(xn, params["head_w"], tn=1024)
    return logits.reshape(B, T, V)


# ---------------------------------------------------------------------------
# Deterministic parameter construction (synthetic, small config).
# Linear weights are stored pre-transposed to (in_features, out_features) and
# cast to bf16 in HBM; biases / LN params stay f32.
# ---------------------------------------------------------------------------
def init_params(key, vocab_size, n_layer, n_embd, block_size):
    D = n_embd
    keys = iter(jax.random.split(key, 3 + 4 * n_layer))
    scale = 0.02

    def w(shape):
        return (scale * jax.random.normal(next(keys), shape,
                                          jnp.float32)).astype(WEIGHT_DTYPE)

    params = {
        "tok_emb": scale * jax.random.normal(next(keys), (vocab_size, D), jnp.float32),
        "pos_emb": scale * jax.random.normal(next(keys), (1, block_size, D), jnp.float32),
        "blocks": [],
        "ln_f_w": jnp.ones((1, D), jnp.float32),
        "ln_f_b": jnp.zeros((1, D), jnp.float32),
    }
    for _ in range(n_layer):
        blk = {
            "wqkv": w((D, 3 * D)),
            "bqkv": jnp.zeros((1, 3 * D), jnp.float32),
            "wo":   w((D, D)),
            "bo":   jnp.zeros((1, D), jnp.float32),
            "ln1w": jnp.ones((1, D), jnp.float32),
            "ln1b": jnp.zeros((1, D), jnp.float32),
            "w1":   w((D, 4 * D)),
            "b1":   jnp.zeros((1, 4 * D), jnp.float32),
            "w2":   w((4 * D, D)),
            "b2":   jnp.zeros((1, D), jnp.float32),
            "ln2w": jnp.ones((1, D), jnp.float32),
            "ln2b": jnp.zeros((1, D), jnp.float32),
        }
        params["blocks"].append(blk)
    params["head_w"] = w((D, vocab_size))
    return params


if __name__ == "__main__":
    # Small synthetic config consistent with GPTConfig's structure.
    VOCAB = 128
    N_LAYER = 2
    N_HEAD = 4
    N_EMBD = 32
    BLOCK_SIZE = 16
    B, T = 2, 8

    key = jax.random.PRNGKey(0)
    k_param, k_idx = jax.random.split(key)
    params = init_params(k_param, VOCAB, N_LAYER, N_EMBD, BLOCK_SIZE)
    idx = jax.random.randint(k_idx, (B, T), 0, VOCAB, dtype=jnp.int32)

    fwd = jax.jit(gpt_forward, static_argnums=(2,))
    logits = fwd(idx, params, N_HEAD)
    jax.block_until_ready(logits)
    assert logits.shape == (B, T, VOCAB), logits.shape
    print("KERNEL_OK")
</pallas_src>

<mosaic_0001>
module attributes {stable_mosaic.version = 11 : i64} {
  func.func @matmul_bias_kernel(%arg0: i32, %arg1: i32, %arg2: i32, %arg3: memref<16x32xbf16, #tpu.memory_space<vmem>>, %arg4: memref<32x96xbf16, #tpu.memory_space<vmem>>, %arg5: memref<1x96xf32, #tpu.memory_space<vmem>>, %arg6: memref<16x96xbf16, #tpu.memory_space<vmem>>, %arg7: memref<16x96xf32, #tpu.memory_space<vmem>>) attributes {dimension_semantics = [#tpu.dimension_semantics<parallel>, #tpu.dimension_semantics<parallel>, #tpu.dimension_semantics<arbitrary>], iteration_bounds = array<i64: 1, 1, 1>, scalar_prefetch = 0 : i64, scratch_operands = 1 : i64, tpu.core_type = #tpu.core_type<tc>, window_params = [{transform_indices = @transform_0, window_bounds = array<i64: 16, 32>}, {transform_indices = @transform_1, window_bounds = array<i64: 32, 96>}, {transform_indices = @transform_2, window_bounds = array<i64: 1, 96>}, {transform_indices = @transform_3, window_bounds = array<i64: 16, 96>}]} {
    %c0_i32 = arith.constant 0 : i32
    %0 = arith.cmpi eq, %arg2, %c0_i32 : i32
    %1 = arith.extui %0 : i1 to i32
    %c0_i32_0 = arith.constant 0 : i32
    %2 = arith.cmpi ne, %1, %c0_i32_0 : i32
    scf.if %2 {
      %cst_10 = arith.constant 0.000000e+00 : f32
      %12 = vector.broadcast %cst_10 : f32 to vector<16x96xf32>
      %c0_11 = arith.constant 0 : index
      %c0_12 = arith.constant 0 : index
      %13 = vector.load %arg7[%c0_11, %c0_12] : memref<16x96xf32, #tpu.memory_space<vmem>>, vector<16x96xf32>
      tpu.vector_store %arg7[%c0_11, %c0_12], %12 {strides = array<i32>} : memref<16x96xf32, #tpu.memory_space<vmem>>, vector<16x96xf32>,
    } else {
    }
    %c0 = arith.constant 0 : index
    %c0_1 = arith.constant 0 : index
    %3 = vector.load %arg7[%c0, %c0_1] : memref<16x96xf32, #tpu.memory_space<vmem>>, vector<16x96xf32>
    %c0_2 = arith.constant 0 : index
    %c0_3 = arith.constant 0 : index
    %4 = vector.load %arg3[%c0_2, %c0_3] : memref<16x32xbf16, #tpu.memory_space<vmem>>, vector<16x32xbf16>
    %c0_4 = arith.constant 0 : index
    %c0_5 = arith.constant 0 : index
    %5 = vector.load %arg4[%c0_4, %c0_5] : memref<32x96xbf16, #tpu.memory_space<vmem>>, vector<32x96xbf16>
    %cst = arith.constant dense<0.000000e+00> : vector<16x96xf32>
    %6 = tpu.matmul %4, %5, %cst {dimension_numbers = #tpu.dot_dimension_numbers<[1], [0], [0], [1], [0, 0, 1, 1], [], []>} : vector<16x32xbf16>, vector<32x96xbf16>, vector<16x96xf32> -> vector<16x96xf32>
    %7 = arith.addf %3, %6 : vector<16x96xf32>
    %c0_6 = arith.constant 0 : index
    %c0_7 = arith.constant 0 : index
    %8 = vector.load %arg7[%c0_6, %c0_7] : memref<16x96xf32, #tpu.memory_space<vmem>>, vector<16x96xf32>
    tpu.vector_store %arg7[%c0_6, %c0_7], %7 {strides = array<i32>} : memref<16x96xf32, #tpu.memory_space<vmem>>, vector<16x96xf32>,
    %c0_i32_8 = arith.constant 0 : i32
    %9 = arith.cmpi eq, %arg2, %c0_i32_8 : i32
    %10 = arith.extui %9 : i1 to i32
    %c0_i32_9 = arith.constant 0 : i32
    %11 = arith.cmpi ne, %10, %c0_i32_9 : i32
    scf.if %11 {
      %c0_10 = arith.constant 0 : index
      %c0_11 = arith.constant 0 : index
      %12 = vector.load %arg7[%c0_10, %c0_11] : memref<16x96xf32, #tpu.memory_space<vmem>>, vector<16x96xf32>
      %c0_12 = arith.constant 0 : index
      %c0_13 = arith.constant 0 : index
      %13 = vector.load %arg5[%c0_12, %c0_13] : memref<1x96xf32, #tpu.memory_space<vmem>>, vector<1x96xf32>
      %14 = vector.broadcast %13 : vector<1x96xf32> to vector<16x96xf32>
      %15 = arith.addf %12, %14 : vector<16x96xf32>
      %16 = arith.truncf %15 : vector<16x96xf32> to vector<16x96xbf16>
      %c0_14 = arith.constant 0 : index
      %c0_15 = arith.constant 0 : index
      %17 = vector.load %arg6[%c0_14, %c0_15] : memref<16x96xbf16, #tpu.memory_space<vmem>>, vector<16x96xbf16>
      tpu.vector_store %arg6[%c0_14, %c0_15], %16 {strides = array<i32>} : memref<16x96xbf16, #tpu.memory_space<vmem>>, vector<16x96xbf16>,
    } else {
    }
    return
  }
  func.func @transform_0(%arg0: i32, %arg1: i32, %arg2: i32) -> (i32, i32) {
    %c0_i32 = arith.constant 0 : i32
    return %arg0, %arg2 : i32, i32
  }
  func.func @transform_1(%arg0: i32, %arg1: i32, %arg2: i32) -> (i32, i32) {
    %c0_i32 = arith.constant 0 : i32
    return %arg2, %arg1 : i32, i32
  }
  func.func @transform_2(%arg0: i32, %arg1: i32, %arg2: i32) -> (i32, i32) {
    %c0_i32 = arith.constant 0 : i32
    %c0_i32_0 = arith.constant 0 : i32
    return %c0_i32, %arg1 : i32, i32
  }
  func.func @transform_3(%arg0: i32, %arg1: i32, %arg2: i32) -> (i32, i32) {
    %c0_i32 = arith.constant 0 : i32
    return %arg0, %arg1 : i32, i32
  }
}

module attributes {stable_mosaic.version = 11 : i64} {
  func.func @flash_attn_kernel(%arg0: i32, %arg1: i32, %arg2: i32, %arg3: memref<1x4x8x8xbf16, #tpu.memory_space<vmem>>, %arg4: memref<1x4x8x8xbf16, #tpu.memory_space<vmem>>, %arg5: memref<1x4x8x8xbf16, #tpu.memory_space<vmem>>, %arg6: memref<1x4x8x8xbf16, #tpu.memory_space<vmem>>, %arg7: memref<4x8x1xf32, #tpu.memory_space<vmem>>, %arg8: memref<4x8x1xf32, #tpu.memory_space<vmem>>, %arg9: memref<4x8x8xf32, #tpu.memory_space<vmem>>) attributes {dimension_semantics = [#tpu.dimension_semantics<parallel>, #tpu.dimension_semantics<parallel>, #tpu.dimension_semantics<arbitrary>], iteration_bounds = array<i64: 2, 1, 1>, scalar_prefetch = 0 : i64, scratch_operands = 3 : i64, tpu.core_type = #tpu.core_type<tc>, window_params = [{transform_indices = @transform_0, window_bounds = array<i64: 1, 4, 8, 8>}, {transform_indices = @transform_1, window_bounds = array<i64: 1, 4, 8, 8>}, {transform_indices = @transform_2, window_bounds = array<i64: 1, 4, 8, 8>}, {transform_indices = @transform_3, window_bounds = array<i64: 1, 4, 8, 8>}]} {
    %c0_i32 = arith.constant 0 : i32
    %0 = arith.cmpi eq, %arg2, %c0_i32 : i32
    %1 = arith.extui %0 : i1 to i32
    %c0_i32_0 = arith.constant 0 : i32
    %2 = arith.cmpi ne, %1, %c0_i32_0 : i32
    scf.if %2 {
      %cst_36 = arith.constant 0xFF800000 : f32
      %38 = vector.broadcast %cst_36 : f32 to vector<4x8x1xf32>
      %c0_37 = arith.constant 0 : index
      %c0_38 = arith.constant 0 : index
      %c0_39 = arith.constant 0 : index
      %39 = vector.load %arg7[%c0_37, %c0_38, %c0_39] : memref<4x8x1xf32, #tpu.memory_space<vmem>>, vector<4x8x1xf32>
      tpu.vector_store %arg7[%c0_37, %c0_38, %c0_39], %38 {strides = array<i32>} : memref<4x8x1xf32, #tpu.memory_space<vmem>>, vector<4x8x1xf32>,
      %cst_40 = arith.constant 0.000000e+00 : f32
      %40 = vector.broadcast %cst_40 : f32 to vector<4x8x1xf32>
      %c0_41 = arith.constant 0 : index
      %c0_42 = arith.constant 0 : index
      %c0_43 = arith.constant 0 : index
      %41 = vector.load %arg8[%c0_41, %c0_42, %c0_43] : memref<4x8x1xf32, #tpu.memory_space<vmem>>, vector<4x8x1xf32>
      tpu.vector_store %arg8[%c0_41, %c0_42, %c0_43], %40 {strides = array<i32>} : memref<4x8x1xf32, #tpu.memory_space<vmem>>, vector<4x8x1xf32>,
      %cst_44 = arith.constant 0.000000e+00 : f32
      %42 = vector.broadcast %cst_44 : f32 to vector<4x8x8xf32>
      %c0_45 = arith.constant 0 : index
      %c0_46 = arith.constant 0 : index
      %c0_47 = arith.constant 0 : index
      %43 = vector.load %arg9[%c0_45, %c0_46, %c0_47] : memref<4x8x8xf32, #tpu.memory_space<vmem>>, vector<4x8x8xf32>
      tpu.vector_store %arg9[%c0_45, %c0_46, %c0_47], %42 {strides = array<i32>} : memref<4x8x8xf32, #tpu.memory_space<vmem>>, vector<4x8x8xf32>,
    } else {
    }
    %c0 = arith.constant 0 : index
    %c0_1 = arith.constant 0 : index
    %c0_2 = arith.constant 0 : index
    %c0_3 = arith.constant 0 : index
    %3 = vector.load %arg3[%c0, %c0_1, %c0_2, %c0_3] : memref<1x4x8x8xbf16, #tpu.memory_space<vmem>>, vector<1x4x8x8xbf16>
    %4 = vector.shape_cast %3 : vector<1x4x8x8xbf16> to vector<4x8x8xbf16>
    %c0_4 = arith.constant 0 : index
    %c0_5 = arith.constant 0 : index
    %c0_6 = arith.constant 0 : index
    %c0_7 = arith.constant 0 : index
    %5 = vector.load %arg4[%c0_4, %c0_5, %c0_6, %c0_7] : memref<1x4x8x8xbf16, #tpu.memory_space<vmem>>, vector<1x4x8x8xbf16>
    %6 = vector.shape_cast %5 : vector<1x4x8x8xbf16> to vector<4x8x8xbf16>
    %c0_8 = arith.constant 0 : index
    %c0_9 = arith.constant 0 : index
    %c0_10 = arith.constant 0 : index
    %c0_11 = arith.constant 0 : index
    %7 = vector.load %arg5[%c0_8, %c0_9, %c0_10, %c0_11] : memref<1x4x8x8xbf16, #tpu.memory_space<vmem>>, vector<1x4x8x8xbf16>
    %8 = vector.shape_cast %7 : vector<1x4x8x8xbf16> to vector<4x8x8xbf16>
    "tpu.trace_start"() <{level = 10 : i32, message = "hqd,hkd->hqk"}> : () -> ()
    %cst = arith.constant dense<0.000000e+00> : vector<4x8x8xf32>
    %9 = tpu.matmul %4, %6, %cst {dimension_numbers = #tpu.dot_dimension_numbers<[2], [2], [1], [1], [0, 0, 0, 1, 1, 1], [0], [0]>} : vector<4x8x8xbf16>, vector<4x8x8xbf16>, vector<4x8x8xf32> -> vector<4x8x8xf32>
    "tpu.trace_stop"() : () -> ()
    %cst_12 = arith.constant 0.353553385 : f32
    %10 = vector.broadcast %cst_12 : f32 to vector<4x8x8xf32>
    %11 = arith.mulf %9, %10 : vector<4x8x8xf32>
    %c0_13 = arith.constant 0 : index
    %c0_14 = arith.constant 0 : index
    %c0_15 = arith.constant 0 : index
    %12 = vector.load %arg7[%c0_13, %c0_14, %c0_15] : memref<4x8x1xf32, #tpu.memory_space<vmem>>, vector<4x8x1xf32>
    %cst_16 = arith.constant dense<0xFF800000> : vector<4x8xf32>
    %13 = vector.multi_reduction <maximumf>, %11, %cst_16 [2] : vector<4x8x8xf32> to vector<4x8xf32>
    %14 = vector.shape_cast %13 : vector<4x8xf32> to vector<4x8x1xf32>
    %15 = arith.maximumf %12, %14 : vector<4x8x1xf32>
    %16 = arith.subf %12, %15 : vector<4x8x1xf32>
    %17 = math.exp %16 : vector<4x8x1xf32>
    %18 = vector.broadcast %15 : vector<4x8x1xf32> to vector<4x8x8xf32>
    %19 = arith.subf %11, %18 : vector<4x8x8xf32>
    %20 = math.exp %19 : vector<4x8x8xf32>
    %c0_17 = arith.constant 0 : index
    %c0_18 = arith.constant 0 : index
    %c0_19 = arith.constant 0 : index
    %21 = vector.load %arg8[%c0_17, %c0_18, %c0_19] : memref<4x8x1xf32, #tpu.memory_space<vmem>>, vector<4x8x1xf32>
    %22 = arith.mulf %17, %21 : vector<4x8x1xf32>
    %cst_20 = arith.constant dense<0.000000e+00> : vector<4x8xf32>
    %23 = vector.multi_reduction <add>, %20, %cst_20 [2] : vector<4x8x8xf32> to vector<4x8xf32>
    %24 = vector.shape_cast %23 : vector<4x8xf32> to vector<4x8x1xf32>
    %25 = arith.addf %22, %24 : vector<4x8x1xf32>
    %c0_21 = arith.constant 0 : index
    %c0_22 = arith.constant 0 : index
    %c0_23 = arith.constant 0 : index
    %26 = vector.load %arg8[%c0_21, %c0_22, %c0_23] : memref<4x8x1xf32, #tpu.memory_space<vmem>>, vector<4x8x1xf32>
    tpu.vector_store %arg8[%c0_21, %c0_22, %c0_23], %25 {strides = array<i32>} : memref<4x8x1xf32, #tpu.memory_space<vmem>>, vector<4x8x1xf32>,
    %c0_24 = arith.constant 0 : index
    %c0_25 = arith.constant 0 : index
    %c0_26 = arith.constant 0 : index
    %27 = vector.load %arg9[%c0_24, %c0_25, %c0_26] : memref<4x8x8xf32, #tpu.memory_space<vmem>>, vector<4x8x8xf32>
    %28 = vector.broadcast %17 : vector<4x8x1xf32> to vector<4x8x8xf32>
    %29 = arith.mulf %28, %27 : vector<4x8x8xf32>
    %30 = arith.truncf %20 : vector<4x8x8xf32> to vector<4x8x8xbf16>
    "tpu.trace_start"() <{level = 10 : i32, message = "hqk,hkd->hqd"}> : () -> ()
    %cst_27 = arith.constant dense<0.000000e+00> : vector<4x8x8xf32>
    %31 = tpu.matmul %30, %8, %cst_27 {dimension_numbers = #tpu.dot_dimension_numbers<[2], [1], [1], [2], [0, 0, 0, 1, 1, 2], [0], [0]>} : vector<4x8x8xbf16>, vector<4x8x8xbf16>, vector<4x8x8xf32> -> vector<4x8x8xf32>
    "tpu.trace_stop"() : () -> ()
    %32 = arith.addf %29, %31 : vector<4x8x8xf32>
    %c0_28 = arith.constant 0 : index
    %c0_29 = arith.constant 0 : index
    %c0_30 = arith.constant 0 : index
    %33 = vector.load %arg9[%c0_28, %c0_29, %c0_30] : memref<4x8x8xf32, #tpu.memory_space<vmem>>, vector<4x8x8xf32>
    tpu.vector_store %arg9[%c0_28, %c0_29, %c0_30], %32 {strides = array<i32>} : memref<4x8x8xf32, #tpu.memory_space<vmem>>, vector<4x8x8xf32>,
    %c0_31 = arith.constant 0 : index
    %c0_32 = arith.constant 0 : index
    %c0_33 = arith.constant 0 : index
    %34 = vector.load %arg7[%c0_31, %c0_32, %c0_33] : memref<4x8x1xf32, #tpu.memory_space<vmem>>, vector<4x8x1xf32>
    tpu.vector_store %arg7[%c0_31, %c0_32, %c0_33], %15 {strides = array<i32>} : memref<4x8x1xf32, #tpu.memory_space<vmem>>, vector<4x8x1xf32>,
    %c0_i32_34 = arith.constant 0 : i32
    %35 = arith.cmpi eq, %arg2, %c0_i32_34 : i32
    %36 = arith.extui %35 : i1 to i32
    %c0_i32_35 = arith.constant 0 : i32
    %37 = arith.cmpi ne, %36, %c0_i32_35 : i32
    scf.if %37 {
      %c0_36 = arith.constant 0 : index
      %c0_37 = arith.constant 0 : index
      %c0_38 = arith.constant 0 : index
      %38 = vector.load %arg8[%c0_36, %c0_37, %c0_38] : memref<4x8x1xf32, #tpu.memory_space<vmem>>, vector<4x8x1xf32>
      %39 = tpu.reciprocal %38 {approx = true} : vector<4x8x1xf32> -> vector<4x8x1xf32>
      %c0_39 = arith.constant 0 : index
      %c0_40 = arith.constant 0 : index
      %c0_41 = arith.constant 0 : index
      %40 = vector.load %arg9[%c0_39, %c0_40, %c0_41] : memref<4x8x8xf32, #tpu.memory_space<vmem>>, vector<4x8x8xf32>
      %41 = vector.broadcast %39 : vector<4x8x1xf32> to vector<4x8x8xf32>
      %42 = arith.mulf %40, %41 : vector<4x8x8xf32>
      %43 = arith.truncf %42 : vector<4x8x8xf32> to vector<4x8x8xbf16>
      %c0_42 = arith.constant 0 : index
      %c0_43 = arith.constant 0 : index
      %c0_44 = arith.constant 0 : index
      %c0_45 = arith.constant 0 : index
      %44 = vector.load %arg6[%c0_42, %c0_43, %c0_44, %c0_45] : memref<1x4x8x8xbf16, #tpu.memory_space<vmem>>, vector<1x4x8x8xbf16>
      %45 = vector.shape_cast %44 : vector<1x4x8x8xbf16> to vector<4x8x8xbf16>
      %46 = vector.shape_cast %43 : vector<4x8x8xbf16> to vector<1x4x8x8xbf16>
      tpu.vector_store %arg6[%c0_42, %c0_43, %c0_44, %c0_45], %46 {strides = array<i32>} : memref<1x4x8x8xbf16, #tpu.memory_space<vmem>>, vector<1x4x8x8xbf16>,
    } else {
    }
    return
  }
  func.func @transform_0(%arg0: i32, %arg1: i32, %arg2: i32) -> (i32, i32, i32, i32) {
    %c0_i32 = arith.constant 0 : i32
    %c0_i32_0 = arith.constant 0 : i32
    %c0_i32_1 = arith.constant 0 : i32
    return %arg0, %c0_i32, %arg1, %c0_i32_0 : i32, i32, i32, i32
  }
  func.func @transform_1(%arg0: i32, %arg1: i32, %arg2: i32) -> (i32, i32, i32, i32) {
    %c0_i32 = arith.constant 0 : i32
    %c0_i32_0 = arith.constant 0 : i32
    %c0_i32_1 = arith.constant 0 : i32
    return %arg0, %c0_i32, %arg2, %c0_i32_0 : i32, i32, i32, i32
  }
  func.func @transform_2(%arg0: i32, %arg1: i32, %arg2: i32) -> (i32, i32, i32, i32) {
    %c0_i32 = arith.constant 0 : i32
    %c0_i32_0 = arith.constant 0 : i32
    %c0_i32_1 = arith.constant 0 : i32
    return %arg0, %c0_i32, %arg2, %c0_i32_0 : i32, i32, i32, i32
  }
  func.func @transform_3(%arg0: i32, %arg1: i32, %arg2: i32) -> (i32, i32, i32, i32) {
    %c0_i32 = arith.constant 0 : i32
    %c0_i32_0 = arith.constant 0 : i32
    %c0_i32_1 = arith.constant 0 : i32
    return %arg0, %c0_i32, %arg1, %c0_i32_0 : i32, i32, i32, i32
  }
}

module attributes {stable_mosaic.version = 11 : i64} {
  func.func @matmul_bias_res_ln_kernel(%arg0: i32, %arg1: i32, %arg2: memref<16x32xbf16, #tpu.memory_space<vmem>>, %arg3: memref<32x32xbf16, #tpu.memory_space<vmem>>, %arg4: memref<1x32xf32, #tpu.memory_space<vmem>>, %arg5: memref<16x32xbf16, #tpu.memory_space<vmem>>, %arg6: memref<1x32xf32, #tpu.memory_space<vmem>>, %arg7: memref<1x32xf32, #tpu.memory_space<vmem>>, %arg8: memref<16x32xbf16, #tpu.memory_space<vmem>>, %arg9: memref<16x32xf32, #tpu.memory_space<vmem>>) attributes {dimension_semantics = [#tpu.dimension_semantics<parallel>, #tpu.dimension_semantics<arbitrary>], iteration_bounds = array<i64: 1, 1>, scalar_prefetch = 0 : i64, scratch_operands = 1 : i64, tpu.core_type = #tpu.core_type<tc>, window_params = [{transform_indices = @transform_0, window_bounds = array<i64: 16, 32>}, {transform_indices = @transform_1, window_bounds = array<i64: 32, 32>}, {pipeline_mode = #tpu.pipeline_mode<synchronous>, transform_indices = @transform_2, window_bounds = array<i64: 1, 32>}, {transform_indices = @transform_3, window_bounds = array<i64: 16, 32>}, {pipeline_mode = #tpu.pipeline_mode<synchronous>, transform_indices = @transform_4, window_bounds = array<i64: 1, 32>}, {pipeline_mode = #tpu.pipeline_mode<synchronous>, transform_indices = @transform_5, window_bounds = array<i64: 1, 32>}, {transform_indices = @transform_6, window_bounds = array<i64: 16, 32>}]} {
    %c0_i32 = arith.constant 0 : i32
    %0 = arith.cmpi eq, %arg1, %c0_i32 : i32
    %1 = arith.extui %0 : i1 to i32
    %c0_i32_0 = arith.constant 0 : i32
    %2 = arith.cmpi ne, %1, %c0_i32_0 : i32
    scf.if %2 {
      %cst_10 = arith.constant 0.000000e+00 : f32
      %12 = vector.broadcast %cst_10 : f32 to vector<16x32xf32>
      %c0_11 = arith.constant 0 : index
      %c0_12 = arith.constant 0 : index
      %13 = vector.load %arg9[%c0_11, %c0_12] : memref<16x32xf32, #tpu.memory_space<vmem>>, vector<16x32xf32>
      tpu.vector_store %arg9[%c0_11, %c0_12], %12 {strides = array<i32>} : memref<16x32xf32, #tpu.memory_space<vmem>>, vector<16x32xf32>,
    } else {
    }
    %c0 = arith.constant 0 : index
    %c0_1 = arith.constant 0 : index
    %3 = vector.load %arg9[%c0, %c0_1] : memref<16x32xf32, #tpu.memory_space<vmem>>, vector<16x32xf32>
    %c0_2 = arith.constant 0 : index
    %c0_3 = arith.constant 0 : index
    %4 = vector.load %arg2[%c0_2, %c0_3] : memref<16x32xbf16, #tpu.memory_space<vmem>>, vector<16x32xbf16>
    %c0_4 = arith.constant 0 : index
    %c0_5 = arith.constant 0 : index
    %5 = vector.load %arg3[%c0_4, %c0_5] : memref<32x32xbf16, #tpu.memory_space<vmem>>, vector<32x32xbf16>
    %cst = arith.constant dense<0.000000e+00> : vector<16x32xf32>
    %6 = tpu.matmul %4, %5, %cst {dimension_numbers = #tpu.dot_dimension_numbers<[1], [0], [0], [1], [0, 0, 1, 1], [], []>} : vector<16x32xbf16>, vector<32x32xbf16>, vector<16x32xf32> -> vector<16x32xf32>
    %7 = arith.addf %3, %6 : vector<16x32xf32>
    %c0_6 = arith.constant 0 : index
    %c0_7 = arith.constant 0 : index
    %8 = vector.load %arg9[%c0_6, %c0_7] : memref<16x32xf32, #tpu.memory_space<vmem>>, vector<16x32xf32>
    tpu.vector_store %arg9[%c0_6, %c0_7], %7 {strides = array<i32>} : memref<16x32xf32, #tpu.memory_space<vmem>>, vector<16x32xf32>,
    %c0_i32_8 = arith.constant 0 : i32
    %9 = arith.cmpi eq, %arg1, %c0_i32_8 : i32
    %10 = arith.extui %9 : i1 to i32
    %c0_i32_9 = arith.constant 0 : i32
    %11 = arith.cmpi ne, %10, %c0_i32_9 : i32
    scf.if %11 {
      %c0_10 = arith.constant 0 : index
      %c0_11 = arith.constant 0 : index
      %12 = vector.load %arg9[%c0_10, %c0_11] : memref<16x32xf32, #tpu.memory_space<vmem>>, vector<16x32xf32>
      %c0_12 = arith.constant 0 : index
      %c0_13 = arith.constant 0 : index
      %13 = vector.load %arg4[%c0_12, %c0_13] : memref<1x32xf32, #tpu.memory_space<vmem>>, vector<1x32xf32>
      %14 = vector.broadcast %13 : vector<1x32xf32> to vector<16x32xf32>
      %15 = arith.addf %12, %14 : vector<16x32xf32>
      %c0_14 = arith.constant 0 : index
      %c0_15 = arith.constant 0 : index
      %16 = vector.load %arg5[%c0_14, %c0_15] : memref<16x32xbf16, #tpu.memory_space<vmem>>, vector<16x32xbf16>
      %17 = arith.extf %16 : vector<16x32xbf16> to vector<16x32xf32>
      %18 = arith.addf %15, %17 : vector<16x32xf32>
      %c0_16 = arith.constant 0 : index
      %c0_17 = arith.constant 0 : index
      %19 = vector.load %arg6[%c0_16, %c0_17] : memref<1x32xf32, #tpu.memory_space<vmem>>, vector<1x32xf32>
      %c0_18 = arith.constant 0 : index
      %c0_19 = arith.constant 0 : index
      %20 = vector.load %arg7[%c0_18, %c0_19] : memref<1x32xf32, #tpu.memory_space<vmem>>, vector<1x32xf32>
      %cst_20 = arith.constant dense<0.000000e+00> : vector<16xf32>
      %21 = vector.multi_reduction <add>, %18, %cst_20 [1] : vector<16x32xf32> to vector<16xf32>
      %22 = vector.shape_cast %21 : vector<16xf32> to vector<16x1xf32>
      %cst_21 = arith.constant 3.200000e+01 : f32
      %23 = vector.broadcast %cst_21 : f32 to vector<16x1xf32>
      %24 = arith.divf %22, %23 : vector<16x1xf32>
      %25 = vector.broadcast %24 : vector<16x1xf32> to vector<16x32xf32>
      %26 = arith.subf %18, %25 : vector<16x32xf32>
      %27 = arith.mulf %26, %26 : vector<16x32xf32>
      %cst_22 = arith.constant dense<0.000000e+00> : vector<16xf32>
      %28 = vector.multi_reduction <add>, %27, %cst_22 [1] : vector<16x32xf32> to vector<16xf32>
      %29 = vector.shape_cast %28 : vector<16xf32> to vector<16x1xf32>
      %cst_23 = arith.constant 3.200000e+01 : f32
      %30 = vector.broadcast %cst_23 : f32 to vector<16x1xf32>
      %31 = arith.divf %29, %30 : vector<16x1xf32>
      %32 = vector.broadcast %24 : vector<16x1xf32> to vector<16x32xf32>
      %33 = arith.subf %18, %32 : vector<16x32xf32>
      %cst_24 = arith.constant 9.99999974E-6 : f32
      %34 = vector.broadcast %cst_24 : f32 to vector<16x1xf32>
      %35 = arith.addf %31, %34 : vector<16x1xf32>
      %36 = math.rsqrt %35 : vector<16x1xf32>
      %37 = vector.broadcast %36 : vector<16x1xf32> to vector<16x32xf32>
      %38 = arith.mulf %33, %37 : vector<16x32xf32>
      %39 = vector.broadcast %19 : vector<1x32xf32> to vector<16x32xf32>
      %40 = arith.mulf %38, %39 : vector<16x32xf32>
      %41 = vector.broadcast %20 : vector<1x32xf32> to vector<16x32xf32>
      %42 = arith.addf %40, %41 : vector<16x32xf32>
      %43 = arith.truncf %42 : vector<16x32xf32> to vector<16x32xbf16>
      %c0_25 = arith.constant 0 : index
      %c0_26 = arith.constant 0 : index
      %44 = vector.load %arg8[%c0_25, %c0_26] : memref<16x32xbf16, #tpu.memory_space<vmem>>, vector<16x32xbf16>
      tpu.vector_store %arg8[%c0_25, %c0_26], %43 {strides = array<i32>} : memref<16x32xbf16, #tpu.memory_space<vmem>>, vector<16x32xbf16>,
    } else {
    }
    return
  }
  func.func @transform_0(%arg0: i32, %arg1: i32) -> (i32, i32) {
    %c0_i32 = arith.constant 0 : i32
    return %arg0, %arg1 : i32, i32
  }
  func.func @transform_1(%arg0: i32, %arg1: i32) -> (i32, i32) {
    %c0_i32 = arith.constant 0 : i32
    %c0_i32_0 = arith.constant 0 : i32
    return %arg1, %c0_i32 : i32, i32
  }
  func.func @transform_2(%arg0: i32, %arg1: i32) -> (i32, i32) {
    %c0_i32 = arith.constant 0 : i32
    %c0_i32_0 = arith.constant 0 : i32
    %c0_i32_1 = arith.constant 0 : i32
    return %c0_i32, %c0_i32_0 : i32, i32
  }
  func.func @transform_3(%arg0: i32, %arg1: i32) -> (i32, i32) {
    %c0_i32 = arith.constant 0 : i32
    %c0_i32_0 = arith.constant 0 : i32
    return %arg0, %c0_i32 : i32, i32
  }
  func.func @transform_4(%arg0: i32, %arg1: i32) -> (i32, i32) {
    %c0_i32 = arith.constant 0 : i32
    %c0_i32_0 = arith.constant 0 : i32
    %c0_i32_1 = arith.constant 0 : i32
    return %c0_i32, %c0_i32_0 : i32, i32
  }
  func.func @transform_5(%arg0: i32, %arg1: i32) -> (i32, i32) {
    %c0_i32 = arith.constant 0 : i32
    %c0_i32_0 = arith.constant 0 : i32
    %c0_i32_1 = arith.constant 0 : i32
    return %c0_i32, %c0_i32_0 : i32, i32
  }
  func.func @transform_6(%arg0: i32, %arg1: i32) -> (i32, i32) {
    %c0_i32 = arith.constant 0 : i32
    %c0_i32_0 = arith.constant 0 : i32
    return %arg0, %c0_i32 : i32, i32
  }
}

module attributes {stable_mosaic.version = 11 : i64} {
  func.func @ffn_res_ln_kernel(%arg0: i32, %arg1: i32, %arg2: memref<16x32xbf16, #tpu.memory_space<vmem>>, %arg3: memref<32x128xbf16, #tpu.memory_space<vmem>>, %arg4: memref<1x128xf32, #tpu.memory_space<vmem>>, %arg5: memref<128x32xbf16, #tpu.memory_space<vmem>>, %arg6: memref<1x32xf32, #tpu.memory_space<vmem>>, %arg7: memref<1x32xf32, #tpu.memory_space<vmem>>, %arg8: memref<1x32xf32, #tpu.memory_space<vmem>>, %arg9: memref<16x32xbf16, #tpu.memory_space<vmem>>, %arg10: memref<16x32xf32, #tpu.memory_space<vmem>>) attributes {dimension_semantics = [#tpu.dimension_semantics<parallel>, #tpu.dimension_semantics<arbitrary>], iteration_bounds = array<i64: 1, 1>, scalar_prefetch = 0 : i64, scratch_operands = 1 : i64, tpu.core_type = #tpu.core_type<tc>, window_params = [{transform_indices = @transform_0, window_bounds = array<i64: 16, 32>}, {transform_indices = @transform_1, window_bounds = array<i64: 32, 128>}, {transform_indices = @transform_2, window_bounds = array<i64: 1, 128>}, {transform_indices = @transform_3, window_bounds = array<i64: 128, 32>}, {pipeline_mode = #tpu.pipeline_mode<synchronous>, transform_indices = @transform_4, window_bounds = array<i64: 1, 32>}, {pipeline_mode = #tpu.pipeline_mode<synchronous>, transform_indices = @transform_5, window_bounds = array<i64: 1, 32>}, {pipeline_mode = #tpu.pipeline_mode<synchronous>, transform_indices = @transform_6, window_bounds = array<i64: 1, 32>}, {transform_indices = @transform_7, window_bounds = array<i64: 16, 32>}]} {
    %c0_i32 = arith.constant 0 : i32
    %0 = arith.cmpi eq, %arg1, %c0_i32 : i32
    %1 = arith.extui %0 : i1 to i32
    %c0_i32_0 = arith.constant 0 : i32
    %2 = arith.cmpi ne, %1, %c0_i32_0 : i32
    scf.if %2 {
      %cst_19 = arith.constant 0.000000e+00 : f32
      %28 = vector.broadcast %cst_19 : f32 to vector<16x32xf32>
      %c0_20 = arith.constant 0 : index
      %c0_21 = arith.constant 0 : index
      %29 = vector.load %arg10[%c0_20, %c0_21] : memref<16x32xf32, #tpu.memory_space<vmem>>, vector<16x32xf32>
      tpu.vector_store %arg10[%c0_20, %c0_21], %28 {strides = array<i32>} : memref<16x32xf32, #tpu.memory_space<vmem>>, vector<16x32xf32>,
    } else {
    }
    %c0 = arith.constant 0 : index
    %c0_1 = arith.constant 0 : index
    %3 = vector.load %arg2[%c0, %c0_1] : memref<16x32xbf16, #tpu.memory_space<vmem>>, vector<16x32xbf16>
    %c0_2 = arith.constant 0 : index
    %c0_3 = arith.constant 0 : index
    %4 = vector.load %arg3[%c0_2, %c0_3] : memref<32x128xbf16, #tpu.memory_space<vmem>>, vector<32x128xbf16>
    %cst = arith.constant dense<0.000000e+00> : vector<16x128xf32>
    %5 = tpu.matmul %3, %4, %cst {dimension_numbers = #tpu.dot_dimension_numbers<[1], [0], [0], [1], [0, 0, 1, 1], [], []>} : vector<16x32xbf16>, vector<32x128xbf16>, vector<16x128xf32> -> vector<16x128xf32>
    %c0_4 = arith.constant 0 : index
    %c0_5 = arith.constant 0 : index
    %6 = vector.load %arg4[%c0_4, %c0_5] : memref<1x128xf32, #tpu.memory_space<vmem>>, vector<1x128xf32>
    %7 = vector.broadcast %6 : vector<1x128xf32> to vector<16x128xf32>
    %8 = arith.addf %5, %7 : vector<16x128xf32>
    %cst_6 = arith.constant 5.000000e-01 : f32
    %9 = vector.broadcast %cst_6 : f32 to vector<16x128xf32>
    %10 = arith.mulf %9, %8 : vector<16x128xf32>
    %cst_7 = arith.constant 2.000000e+00 : f32
    %11 = math.sqrt %cst_7 : f32
    %cst_8 = arith.constant 1.000000e+00 : f32
    %12 = arith.divf %cst_8, %11 : f32
    %13 = vector.broadcast %12 : f32 to vector<16x128xf32>
    %14 = arith.mulf %8, %13 : vector<16x128xf32>
    %15 = math.erf %14 : vector<16x128xf32>
    %cst_9 = arith.constant 1.000000e+00 : f32
    %16 = vector.broadcast %cst_9 : f32 to vector<16x128xf32>
    %17 = arith.addf %16, %15 : vector<16x128xf32>
    %18 = arith.mulf %10, %17 : vector<16x128xf32>
    %c0_10 = arith.constant 0 : index
    %c0_11 = arith.constant 0 : index
    %19 = vector.load %arg10[%c0_10, %c0_11] : memref<16x32xf32, #tpu.memory_space<vmem>>, vector<16x32xf32>
    %20 = arith.truncf %18 : vector<16x128xf32> to vector<16x128xbf16>
    %c0_12 = arith.constant 0 : index
    %c0_13 = arith.constant 0 : index
    %21 = vector.load %arg5[%c0_12, %c0_13] : memref<128x32xbf16, #tpu.memory_space<vmem>>, vector<128x32xbf16>
    %cst_14 = arith.constant dense<0.000000e+00> : vector<16x32xf32>
    %22 = tpu.matmul %20, %21, %cst_14 {dimension_numbers = #tpu.dot_dimension_numbers<[1], [0], [0], [1], [0, 0, 1, 1], [], []>} : vector<16x128xbf16>, vector<128x32xbf16>, vector<16x32xf32> -> vector<16x32xf32>
    %23 = arith.addf %19, %22 : vector<16x32xf32>
    %c0_15 = arith.constant 0 : index
    %c0_16 = arith.constant 0 : index
    %24 = vector.load %arg10[%c0_15, %c0_16] : memref<16x32xf32, #tpu.memory_space<vmem>>, vector<16x32xf32>
    tpu.vector_store %arg10[%c0_15, %c0_16], %23 {strides = array<i32>} : memref<16x32xf32, #tpu.memory_space<vmem>>, vector<16x32xf32>,
    %c0_i32_17 = arith.constant 0 : i32
    %25 = arith.cmpi eq, %arg1, %c0_i32_17 : i32
    %26 = arith.extui %25 : i1 to i32
    %c0_i32_18 = arith.constant 0 : i32
    %27 = arith.cmpi ne, %26, %c0_i32_18 : i32
    scf.if %27 {
      %c0_19 = arith.constant 0 : index
      %c0_20 = arith.constant 0 : index
      %28 = vector.load %arg10[%c0_19, %c0_20] : memref<16x32xf32, #tpu.memory_space<vmem>>, vector<16x32xf32>
      %c0_21 = arith.constant 0 : index
      %c0_22 = arith.constant 0 : index
      %29 = vector.load %arg6[%c0_21, %c0_22] : memref<1x32xf32, #tpu.memory_space<vmem>>, vector<1x32xf32>
      %30 = vector.broadcast %29 : vector<1x32xf32> to vector<16x32xf32>
      %31 = arith.addf %28, %30 : vector<16x32xf32>
      %c0_23 = arith.constant 0 : index
      %c0_24 = arith.constant 0 : index
      %32 = vector.load %arg2[%c0_23, %c0_24] : memref<16x32xbf16, #tpu.memory_space<vmem>>, vector<16x32xbf16>
      %33 = arith.extf %32 : vector<16x32xbf16> to vector<16x32xf32>
      %34 = arith.addf %31, %33 : vector<16x32xf32>
      %c0_25 = arith.constant 0 : index
      %c0_26 = arith.constant 0 : index
      %35 = vector.load %arg7[%c0_25, %c0_26] : memref<1x32xf32, #tpu.memory_space<vmem>>, vector<1x32xf32>
      %c0_27 = arith.constant 0 : index
      %c0_28 = arith.constant 0 : index
      %36 = vector.load %arg8[%c0_27, %c0_28] : memref<1x32xf32, #tpu.memory_space<vmem>>, vector<1x32xf32>
      %cst_29 = arith.constant dense<0.000000e+00> : vector<16xf32>
      %37 = vector.multi_reduction <add>, %34, %cst_29 [1] : vector<16x32xf32> to vector<16xf32>
      %38 = vector.shape_cast %37 : vector<16xf32> to vector<16x1xf32>
      %cst_30 = arith.constant 3.200000e+01 : f32
      %39 = vector.broadcast %cst_30 : f32 to vector<16x1xf32>
      %40 = arith.divf %38, %39 : vector<16x1xf32>
      %41 = vector.broadcast %40 : vector<16x1xf32> to vector<16x32xf32>
      %42 = arith.subf %34, %41 : vector<16x32xf32>
      %43 = arith.mulf %42, %42 : vector<16x32xf32>
      %cst_31 = arith.constant dense<0.000000e+00> : vector<16xf32>
      %44 = vector.multi_reduction <add>, %43, %cst_31 [1] : vector<16x32xf32> to vector<16xf32>
      %45 = vector.shape_cast %44 : vector<16xf32> to vector<16x1xf32>
      %cst_32 = arith.constant 3.200000e+01 : f32
      %46 = vector.broadcast %cst_32 : f32 to vector<16x1xf32>
      %47 = arith.divf %45, %46 : vector<16x1xf32>
      %48 = vector.broadcast %40 : vector<16x1xf32> to vector<16x32xf32>
      %49 = arith.subf %34, %48 : vector<16x32xf32>
      %cst_33 = arith.constant 9.99999974E-6 : f32
      %50 = vector.broadcast %cst_33 : f32 to vector<16x1xf32>
      %51 = arith.addf %47, %50 : vector<16x1xf32>
      %52 = math.rsqrt %51 : vector<16x1xf32>
      %53 = vector.broadcast %52 : vector<16x1xf32> to vector<16x32xf32>
      %54 = arith.mulf %49, %53 : vector<16x32xf32>
      %55 = vector.broadcast %35 : vector<1x32xf32> to vector<16x32xf32>
      %56 = arith.mulf %54, %55 : vector<16x32xf32>
      %57 = vector.broadcast %36 : vector<1x32xf32> to vector<16x32xf32>
      %58 = arith.addf %56, %57 : vector<16x32xf32>
      %59 = arith.truncf %58 : vector<16x32xf32> to vector<16x32xbf16>
      %c0_34 = arith.constant 0 : index
      %c0_35 = arith.constant 0 : index
      %60 = vector.load %arg9[%c0_34, %c0_35] : memref<16x32xbf16, #tpu.memory_space<vmem>>, vector<16x32xbf16>
      tpu.vector_store %arg9[%c0_34, %c0_35], %59 {strides = array<i32>} : memref<16x32xbf16, #tpu.memory_space<vmem>>, vector<16x32xbf16>,
    } else {
    }
    return
  }
  func.func @transform_0(%arg0: i32, %arg1: i32) -> (i32, i32) {
    %c0_i32 = arith.constant 0 : i32
    %c0_i32_0 = arith.constant 0 : i32
    return %arg0, %c0_i32 : i32, i32
  }
  func.func @transform_1(%arg0: i32, %arg1: i32) -> (i32, i32) {
    %c0_i32 = arith.constant 0 : i32
    %c0_i32_0 = arith.constant 0 : i32
    return %c0_i32, %arg1 : i32, i32
  }
  func.func @transform_2(%arg0: i32, %arg1: i32) -> (i32, i32) {
    %c0_i32 = arith.constant 0 : i32
    %c0_i32_0 = arith.constant 0 : i32
    return %c0_i32, %arg1 : i32, i32
  }
  func.func @transform_3(%arg0: i32, %arg1: i32) -> (i32, i32) {
    %c0_i32 = arith.constant 0 : i32
    %c0_i32_0 = arith.constant 0 : i32
    return %arg1, %c0_i32 : i32, i32
  }
  func.func @transform_4(%arg0: i32, %arg1: i32) -> (i32, i32) {
    %c0_i32 = arith.constant 0 : i32
    %c0_i32_0 = arith.constant 0 : i32
    %c0_i32_1 = arith.constant 0 : i32
    return %c0_i32, %c0_i32_0 : i32, i32
  }
  func.func @transform_5(%arg0: i32, %arg1: i32) -> (i32, i32) {
    %c0_i32 = arith.constant 0 : i32
    %c0_i32_0 = arith.constant 0 : i32
    %c0_i32_1 = arith.constant 0 : i32
    return %c0_i32, %c0_i32_0 : i32, i32
  }
  func.func @transform_6(%arg0: i32, %arg1: i32) -> (i32, i32) {
    %c0_i32 = arith.constant 0 : i32
    %c0_i32_0 = arith.constant 0 : i32
    %c0_i32_1 = arith.constant 0 : i32
    return %c0_i32, %c0_i32_0 : i32, i32
  }
  func.func @transform_7(%arg0: i32, %arg1: i32) -> (i32, i32) {
    %c0_i32 = arith.constant 0 : i32
    %c0_i32_0 = arith.constant 0 : i32
    return %arg0, %c0_i32 : i32, i32
  }
}

module attributes {stable_mosaic.version = 11 : i64} {
  func.func @ln_kernel(%arg0: i32, %arg1: memref<16x32xbf16, #tpu.memory_space<vmem>>, %arg2: memref<1x32xf32, #tpu.memory_space<vmem>>, %arg3: memref<1x32xf32, #tpu.memory_space<vmem>>, %arg4: memref<16x32xbf16, #tpu.memory_space<vmem>>) attributes {dimension_semantics = [#tpu.dimension_semantics<parallel>], iteration_bounds = array<i64: 1>, scalar_prefetch = 0 : i64, scratch_operands = 0 : i64, tpu.core_type = #tpu.core_type<tc>, window_params = [{transform_indices = @transform_0, window_bounds = array<i64: 16, 32>}, {pipeline_mode = #tpu.pipeline_mode<synchronous>, transform_indices = @transform_1, window_bounds = array<i64: 1, 32>}, {pipeline_mode = #tpu.pipeline_mode<synchronous>, transform_indices = @transform_2, window_bounds = array<i64: 1, 32>}, {transform_indices = @transform_3, window_bounds = array<i64: 16, 32>}]} {
    %c0 = arith.constant 0 : index
    %c0_0 = arith.constant 0 : index
    %0 = vector.load %arg1[%c0, %c0_0] : memref<16x32xbf16, #tpu.memory_space<vmem>>, vector<16x32xbf16>
    %1 = arith.extf %0 : vector<16x32xbf16> to vector<16x32xf32>
    %c0_1 = arith.constant 0 : index
    %c0_2 = arith.constant 0 : index
    %2 = vector.load %arg2[%c0_1, %c0_2] : memref<1x32xf32, #tpu.memory_space<vmem>>, vector<1x32xf32>
    %c0_3 = arith.constant 0 : index
    %c0_4 = arith.constant 0 : index
    %3 = vector.load %arg3[%c0_3, %c0_4] : memref<1x32xf32, #tpu.memory_space<vmem>>, vector<1x32xf32>
    %cst = arith.constant dense<0.000000e+00> : vector<16xf32>
    %4 = vector.multi_reduction <add>, %1, %cst [1] : vector<16x32xf32> to vector<16xf32>
    %5 = vector.shape_cast %4 : vector<16xf32> to vector<16x1xf32>
    %cst_5 = arith.constant 3.200000e+01 : f32
    %6 = vector.broadcast %cst_5 : f32 to vector<16x1xf32>
    %7 = arith.divf %5, %6 : vector<16x1xf32>
    %8 = vector.broadcast %7 : vector<16x1xf32> to vector<16x32xf32>
    %9 = arith.subf %1, %8 : vector<16x32xf32>
    %10 = arith.mulf %9, %9 : vector<16x32xf32>
    %cst_6 = arith.constant dense<0.000000e+00> : vector<16xf32>
    %11 = vector.multi_reduction <add>, %10, %cst_6 [1] : vector<16x32xf32> to vector<16xf32>
    %12 = vector.shape_cast %11 : vector<16xf32> to vector<16x1xf32>
    %cst_7 = arith.constant 3.200000e+01 : f32
    %13 = vector.broadcast %cst_7 : f32 to vector<16x1xf32>
    %14 = arith.divf %12, %13 : vector<16x1xf32>
    %15 = vector.broadcast %7 : vector<16x1xf32> to vector<16x32xf32>
    %16 = arith.subf %1, %15 : vector<16x32xf32>
    %cst_8 = arith.constant 9.99999974E-6 : f32
    %17 = vector.broadcast %cst_8 : f32 to vector<16x1xf32>
    %18 = arith.addf %14, %17 : vector<16x1xf32>
    %19 = math.rsqrt %18 : vector<16x1xf32>
    %20 = vector.broadcast %19 : vector<16x1xf32> to vector<16x32xf32>
    %21 = arith.mulf %16, %20 : vector<16x32xf32>
    %22 = vector.broadcast %2 : vector<1x32xf32> to vector<16x32xf32>
    %23 = arith.mulf %21, %22 : vector<16x32xf32>
    %24 = vector.broadcast %3 : vector<1x32xf32> to vector<16x32xf32>
    %25 = arith.addf %23, %24 : vector<16x32xf32>
    %26 = arith.truncf %25 : vector<16x32xf32> to vector<16x32xbf16>
    %c0_9 = arith.constant 0 : index
    %c0_10 = arith.constant 0 : index
    %27 = vector.load %arg4[%c0_9, %c0_10] : memref<16x32xbf16, #tpu.memory_space<vmem>>, vector<16x32xbf16>
    tpu.vector_store %arg4[%c0_9, %c0_10], %26 {strides = array<i32>} : memref<16x32xbf16, #tpu.memory_space<vmem>>, vector<16x32xbf16>,
    return
  }
  func.func @transform_0(%arg0: i32) -> (i32, i32) {
    %c0_i32 = arith.constant 0 : i32
    %c0_i32_0 = arith.constant 0 : i32
    return %arg0, %c0_i32 : i32, i32
  }
  func.func @transform_1(%arg0: i32) -> (i32, i32) {
    %c0_i32 = arith.constant 0 : i32
    %c0_i32_0 = arith.constant 0 : i32
    %c0_i32_1 = arith.constant 0 : i32
    return %c0_i32, %c0_i32_0 : i32, i32
  }
  func.func @transform_2(%arg0: i32) -> (i32, i32) {
    %c0_i32 = arith.constant 0 : i32
    %c0_i32_0 = arith.constant 0 : i32
    %c0_i32_1 = arith.constant 0 : i32
    return %c0_i32, %c0_i32_0 : i32, i32
  }
  func.func @transform_3(%arg0: i32) -> (i32, i32) {
    %c0_i32 = arith.constant 0 : i32
    %c0_i32_0 = arith.constant 0 : i32
    return %arg0, %c0_i32 : i32, i32
  }
}

module attributes {stable_mosaic.version = 11 : i64} {
  func.func @matmul_nobias_kernel(%arg0: i32, %arg1: i32, %arg2: i32, %arg3: memref<16x32xbf16, #tpu.memory_space<vmem>>, %arg4: memref<32x128xbf16, #tpu.memory_space<vmem>>, %arg5: memref<16x128xbf16, #tpu.memory_space<vmem>>, %arg6: memref<16x128xf32, #tpu.memory_space<vmem>>) attributes {dimension_semantics = [#tpu.dimension_semantics<parallel>, #tpu.dimension_semantics<parallel>, #tpu.dimension_semantics<arbitrary>], iteration_bounds = array<i64: 1, 1, 1>, scalar_prefetch = 0 : i64, scratch_operands = 1 : i64, tpu.core_type = #tpu.core_type<tc>, window_params = [{transform_indices = @transform_0, window_bounds = array<i64: 16, 32>}, {transform_indices = @transform_1, window_bounds = array<i64: 32, 128>}, {transform_indices = @transform_2, window_bounds = array<i64: 16, 128>}]} {
    %c0_i32 = arith.constant 0 : i32
    %0 = arith.cmpi eq, %arg2, %c0_i32 : i32
    %1 = arith.extui %0 : i1 to i32
    %c0_i32_0 = arith.constant 0 : i32
    %2 = arith.cmpi ne, %1, %c0_i32_0 : i32
    scf.if %2 {
      %cst_10 = arith.constant 0.000000e+00 : f32
      %12 = vector.broadcast %cst_10 : f32 to vector<16x128xf32>
      %c0_11 = arith.constant 0 : index
      %c0_12 = arith.constant 0 : index
      %13 = vector.load %arg6[%c0_11, %c0_12] : memref<16x128xf32, #tpu.memory_space<vmem>>, vector<16x128xf32>
      tpu.vector_store %arg6[%c0_11, %c0_12], %12 {strides = array<i32>} : memref<16x128xf32, #tpu.memory_space<vmem>>, vector<16x128xf32>,
    } else {
    }
    %c0 = arith.constant 0 : index
    %c0_1 = arith.constant 0 : index
    %3 = vector.load %arg6[%c0, %c0_1] : memref<16x128xf32, #tpu.memory_space<vmem>>, vector<16x128xf32>
    %c0_2 = arith.constant 0 : index
    %c0_3 = arith.constant 0 : index
    %4 = vector.load %arg3[%c0_2, %c0_3] : memref<16x32xbf16, #tpu.memory_space<vmem>>, vector<16x32xbf16>
    %c0_4 = arith.constant 0 : index
    %c0_5 = arith.constant 0 : index
    %5 = vector.load %arg4[%c0_4, %c0_5] : memref<32x128xbf16, #tpu.memory_space<vmem>>, vector<32x128xbf16>
    %cst = arith.constant dense<0.000000e+00> : vector<16x128xf32>
    %6 = tpu.matmul %4, %5, %cst {dimension_numbers = #tpu.dot_dimension_numbers<[1], [0], [0], [1], [0, 0, 1, 1], [], []>} : vector<16x32xbf16>, vector<32x128xbf16>, vector<16x128xf32> -> vector<16x128xf32>
    %7 = arith.addf %3, %6 : vector<16x128xf32>
    %c0_6 = arith.constant 0 : index
    %c0_7 = arith.constant 0 : index
    %8 = vector.load %arg6[%c0_6, %c0_7] : memref<16x128xf32, #tpu.memory_space<vmem>>, vector<16x128xf32>
    tpu.vector_store %arg6[%c0_6, %c0_7], %7 {strides = array<i32>} : memref<16x128xf32, #tpu.memory_space<vmem>>, vector<16x128xf32>,
    %c0_i32_8 = arith.constant 0 : i32
    %9 = arith.cmpi eq, %arg2, %c0_i32_8 : i32
    %10 = arith.extui %9 : i1 to i32
    %c0_i32_9 = arith.constant 0 : i32
    %11 = arith.cmpi ne, %10, %c0_i32_9 : i32
    scf.if %11 {
      %c0_10 = arith.constant 0 : index
      %c0_11 = arith.constant 0 : index
      %12 = vector.load %arg6[%c0_10, %c0_11] : memref<16x128xf32, #tpu.memory_space<vmem>>, vector<16x128xf32>
      %13 = arith.truncf %12 : vector<16x128xf32> to vector<16x128xbf16>
      %c0_12 = arith.constant 0 : index
      %c0_13 = arith.constant 0 : index
      %14 = vector.load %arg5[%c0_12, %c0_13] : memref<16x128xbf16, #tpu.memory_space<vmem>>, vector<16x128xbf16>
      tpu.vector_store %arg5[%c0_12, %c0_13], %13 {strides = array<i32>} : memref<16x128xbf16, #tpu.memory_space<vmem>>, vector<16x128xbf16>,
    } else {
    }
    return
  }
  func.func @transform_0(%arg0: i32, %arg1: i32, %arg2: i32) -> (i32, i32) {
    %c0_i32 = arith.constant 0 : i32
    return %arg0, %arg2 : i32, i32
  }
  func.func @transform_1(%arg0: i32, %arg1: i32, %arg2: i32) -> (i32, i32) {
    %c0_i32 = arith.constant 0 : i32
    return %arg2, %arg1 : i32, i32
  }
  func.func @transform_2(%arg0: i32, %arg1: i32, %arg2: i32) -> (i32, i32) {
    %c0_i32 = arith.constant 0 : i32
    return %arg0, %arg1 : i32, i32
  }
}

</mosaic_0001>

<llo_original>
// kernel: gpt_forward.10
$region0: #{gpt_forward.10}
  #allocation0 [shape = 'u32[]', space=smem, size = 0x4, offset = 0x4, fixed_abs, tag = 'smem constant byte address 0x4 - core index']
  #allocation1 [shape = 'u32[144,128]{1,0:T(1,128)}', space=vmem, size = 0x12000, scoped, tag = 'internal scratch']
  #allocation2 [shape = 'f32[16,96]{1,0:T(8,128)}', space=vmem, size = 0x2000, scoped, tag = 'scratch operand']
  %s0 = inlined_call_operand.vmem [shape: bf16[16,32], index: 0, kind: input, shape index: {}]
  %s1 = inlined_call_operand.vmem [shape: bf16[32,96], index: 1, kind: input, shape index: {}]
  %s2 = inlined_call_operand.vmem [shape: f32[1,96], index: 2, kind: input, shape index: {}]
  %s3 = inlined_call_operand.vmem [shape: bf16[16,96], index: 3, kind: output, shape index: {}]
  %s4 = sld [smem:[#allocation0]]
  $region30: #{gpt_forward.10} parent=0
    _
  %s6 = ssub.s32 1, %s4
  %s7 = scalar_select 0, %s6, %s4
  // Predicated region
  $region2: #{gpt_forward.10} parent=0 // pred_check
    _
  $region3: #{gpt_forward.10} parent=0 // pred_check_branch
    %9 = sbr.rel (0) target = $region5
  $region4: #{gpt_forward.10} parent=0 // pred_region
    _
  $region5: #{gpt_forward.10} parent=0 // pred_fallthru
    _
  // Predicated region
  $region6: #{gpt_forward.10} parent=0 // pred_check
    _
  $region7: #{gpt_forward.10} parent=0 // pred_check_branch
    %11 = sbr.rel (0) target = $region9
  $region8: #{gpt_forward.10} parent=0 // pred_region
    _
  $region9: #{gpt_forward.10} parent=0 // pred_fallthru
    _
  // Predicated region
  $region10: #{gpt_forward.10} parent=0 // pred_check
    _
  $region11: #{gpt_forward.10} parent=0 // pred_check_branch
    %13 = sbr.rel (0) target = $region13
  $region12: #{gpt_forward.10} parent=0 // pred_region
    _
  $region13: #{gpt_forward.10} parent=0 // pred_fallthru
    _
  %p15 = scmp.eq.s32.totalorder 0, 0
  // Predicated region
  $region14: #{gpt_forward.10} parent=0 // pred_check
    %p16 = pneg %p15
  $region15: #{gpt_forward.10} parent=0 // pred_check_branch
    %18 = sbr.rel (%p16) target = $region17
  $region16: #{gpt_forward.10} parent=0 // pred_region
    %vm19 = vcmask 785408
    %20 = vst.msk [vmem:[#allocation2] sm:$0xff] %vm19, 0.0
    %21 = vst.msk [vmem:[#allocation2 + $0x8] sm:$0xff] %vm19, 0.0
  $region17: #{gpt_forward.10} parent=0 // pred_fallthru
    _
  %v22 = vld [vmem:[#allocation2] sm:$0xff]
  %v23 = vld [vmem:[#allocation2 + $0x8] sm:$0xff]
  %v24 = vld [vmem:[%s0] sm:$0xf]
  %v25 = vld [vmem:[%s0 + $0x4] sm:$0xf]
  %v26 = vld [vmem:[%s1] sm:$0xf]
  %v27 = vld [vmem:[%s1 + $0x4] sm:$0xf]
  %v28 = vld [vmem:[%s1 + $0x8] sm:$0xf]
  %v29 = vld [vmem:[%s1 + $0xc] sm:$0xf]
  %v32 = vunpack.c.l.b16 %v24
  %v33 = vunpack.c.l.b16 %v25
  %v34 = vpack.c.b16 %v33, %v32
  %v39 = vunpack.c.l.b16 %v26
  %v40 = vunpack.c.l.b16 %v27
  %v41 = vunpack.c.l.b16 %v28
  %v42 = vunpack.c.l.b16 %v29
  %v43 = vpack.c.b16 %v40, %v39
  %v44 = vpack.c.b16 %v42, %v41
  %vm47 = vcmask 261120
  %v49 = vsel %vm47, %v34, 0
  %51 = vmatprep.subr.bf16.mxu0 0
  %52 = vmatpush1.bf16.msra.mxu0 0
  %53 = vmatprep.subr.bf16.mxu0 0
  %54 = vmatpush1.bf16.msra.mxu0 0
  %55 = vmatprep.subr.bf16.mxu0 0
  %56 = vmatpush1.bf16.msra.mxu0 0
  %57 = vmatprep.subr.bf16.mxu0 0
  %58 = vmatpush1.bf16.msra.mxu0 0
  %59 = vmatprep.subr.bf16.mxu0 0
  %60 = vmatpush1.bf16.msra.mxu0 0
  %61 = vmatprep.subr.bf16.mxu0 0
  %62 = vmatpush1.bf16.msra.mxu0 0
  %63 = vmatprep.subr.bf16.mxu0 0
  %64 = vmatpush1.bf16.msra.mxu0 %v44
  %65 = vmatprep.subr.bf16.mxu0 0
  %66 = vmatpush1.bf16.msra.mxu0 %v43
  %67 = vmatprep.subr.bf16.mxu0 0
  %68 = vmatpush2.bf16.msra.mxu0 0
  %69 = vmatprep.subr.bf16.mxu0 0
  %70 = vmatpush2.bf16.msra.mxu0 0
  %71 = vmatprep.subr.bf16.mxu0 0
  %72 = vmatpush2.bf16.msra.mxu0 0
  %73 = vmatprep.subr.bf16.mxu0 0
  %74 = vmatpush2.bf16.msra.mxu0 0
  %75 = vmatprep.subr.bf16.mxu0 0
  %76 = vmatpush2.bf16.msra.mxu0 0
  %77 = vmatprep.subr.bf16.mxu0 0
  %78 = vmatpush2.bf16.msra.mxu0 0
  %79 = vmatprep.subr.bf16.mxu0 0
  %80 = vmatpush2.bf16.msra.mxu0 0
  %81 = vmatprep.subr.bf16.mxu0 0
  %82 = vmatpush2.bf16.msra.mxu0 0
  %83 = vmatprep.mubr.bf16.mxu0 0
  %84 = vmatmul.mubr.bf16.gmra.mxu0 %v49
  %v85 = vpop.f32.mrf.mxu0
  %v86 = vadd.f32 0.0, %v85
  %v87 = vpop.f32.mrf.mxu0
  %v88 = vpop.f32.mrf.mxu0
  %v89 = vadd.f32 0.0, %v88
  %v90 = vpop.f32.mrf.mxu0
  %91 = vdwg.mxu0
  %v92 = vadd.f32 %v22, %v86
  %v93 = vadd.f32 %v23, %v89
  %vm94 = vcmask 785408
  %95 = vst.msk [vmem:[#allocation2] sm:$0xff] %vm94, %v92
  %96 = vst.msk [vmem:[#allocation2 + $0x8] sm:$0xff] %vm94, %v93
  // Predicated region
  $region18: #{gpt_forward.10} parent=0 // pred_check
    %p97 = pneg %p15
  $region19: #{gpt_forward.10} parent=0 // pred_check_branch
    %99 = sbr.rel (%p97) target = $region21
  $region20: #{gpt_forward.10} parent=0 // pred_region
    %v100 = vld [vmem:[#allocation2] sm:$0xff]
    %v101 = vld [vmem:[#allocation2 + $0x8] sm:$0xff]
    %v102 = vld [vmem:[%s2] sm:$0x1]
    %v104 = vlaneseq
    %v105 = vshrl.u32 %v104, 7
    %v106 = vsub.s32 0, %v105
    %v107 = vrot.slane %v102, %v106
    %v109 = vadd.f32 %v100, %v107
    %v110 = vadd.f32 %v101, %v107
    %v111 = vpack.c.bf16 %v110, %v109
    %v113 = vunpack.c.l.b16 %v111
    %v114 = vunpack.c.h.b16 %v111
    %v115 = vpack.c.b16 %v113, %v113
    %v116 = vpack.c.b16 %v114, %v114
    %vm119 = vcmask 781312
    %120 = vst.msk [vmem:[%s3] sm:$0xf] %vm119, %v115
    %121 = vst.msk [vmem:[%s3 + $0x4] sm:$0xf] %vm119, %v116
  $region21: #{gpt_forward.10} parent=0 // pred_fallthru
    _
  // Predicated region
  $region22: #{gpt_forward.10} parent=0 // pred_check
    _
  $region23: #{gpt_forward.10} parent=0 // pred_check_branch
    %123 = sbr.rel (0) target = $region25
  $region24: #{gpt_forward.10} parent=0 // pred_region
    _
  $region25: #{gpt_forward.10} parent=0 // pred_fallthru
    _
  // Predicated region
  $region26: #{gpt_forward.10} parent=0 // pred_check
    _
  $region27: #{gpt_forward.10} parent=0 // pred_check_branch
    %125 = sbr.rel (0) target = $region29
  $region28: #{gpt_forward.10} parent=0 // pred_region
    _
  $region29: #{gpt_forward.10} parent=0 // pred_fallthru
    _

// kernel: gpt_forward.12
$region0: #{gpt_forward.12}
  #allocation0 [shape = 'u32[]', space=smem, size = 0x4, offset = 0x4, fixed_abs, tag = 'smem constant byte address 0x4 - core index']
  #allocation1 [shape = 'u32[144,128]{1,0:T(1,128)}', space=vmem, size = 0x12000, scoped, tag = 'internal scratch']
  #allocation2 [shape = 'f32[16,32]{1,0:T(8,128)}', space=vmem, size = 0x2000, scoped, tag = 'scratch operand']
  %s0 = inlined_call_operand.vmem [shape: bf16[16,32], index: 0, kind: input, shape index: {}]
  %s1 = inlined_call_operand.vmem [shape: bf16[32,32], index: 1, kind: input, shape index: {}]
  %s2 = inlined_call_operand.vmem [shape: f32[1,32], index: 2, kind: input, shape index: {}]
  %s3 = inlined_call_operand.vmem [shape: bf16[16,32], index: 3, kind: input, shape index: {}]
  %s4 = inlined_call_operand.vmem [shape: f32[1,32], index: 4, kind: input, shape index: {}]
  %s5 = inlined_call_operand.vmem [shape: f32[1,32], index: 5, kind: input, shape index: {}]
  %s6 = inlined_call_operand.vmem [shape: bf16[16,32], index: 6, kind: output, shape index: {}]
  %s7 = sld [smem:[#allocation0]]
  $region42: #{gpt_forward.12} parent=0
    _
  %s9 = ssub.s32 1, %s7
  %s10 = scalar_select 0, %s9, %s7
  // Predicated region
  $region2: #{gpt_forward.12} parent=0 // pred_check
    _
  $region3: #{gpt_forward.12} parent=0 // pred_check_branch
    %12 = sbr.rel (0) target = $region5
  $region4: #{gpt_forward.12} parent=0 // pred_region
    _
  $region5: #{gpt_forward.12} parent=0 // pred_fallthru
    _
  // Predicated region
  $region6: #{gpt_forward.12} parent=0 // pred_check
    _
  $region7: #{gpt_forward.12} parent=0 // pred_check_branch
    %14 = sbr.rel (0) target = $region9
  $region8: #{gpt_forward.12} parent=0 // pred_region
    _
  $region9: #{gpt_forward.12} parent=0 // pred_fallthru
    _
  // Predicated region
  $region10: #{gpt_forward.12} parent=0 // pred_check
    _
  $region11: #{gpt_forward.12} parent=0 // pred_check_branch
    %16 = sbr.rel (0) target = $region13
  $region12: #{gpt_forward.12} parent=0 // pred_region
    _
  $region13: #{gpt_forward.12} parent=0 // pred_fallthru
    _
  // Predicated region
  $region14: #{gpt_forward.12} parent=0 // pred_check
    _
  $region15: #{gpt_forward.12} parent=0 // pred_check_branch
    %18 = sbr.rel (0) target = $region17
  $region16: #{gpt_forward.12} parent=0 // pred_region
    _
  $region17: #{gpt_forward.12} parent=0 // pred_fallthru
    _
  // Predicated region
  $region18: #{gpt_forward.12} parent=0 // pred_check
    _
  $region19: #{gpt_forward.12} parent=0 // pred_check_branch
    %20 = sbr.rel (0) target = $region21
  $region20: #{gpt_forward.12} parent=0 // pred_region
    _
  $region21: #{gpt_forward.12} parent=0 // pred_fallthru
    _
  // Predicated region
  $region22: #{gpt_forward.12} parent=0 // pred_check
    _
  $region23: #{gpt_forward.12} parent=0 // pred_check_branch
    %22 = sbr.rel (0) target = $region25
  $region24: #{gpt_forward.12} parent=0 // pred_region
    _
  $region25: #{gpt_forward.12} parent=0 // pred_fallthru
    _
  %p24 = scmp.eq.s32.totalorder 0, 0
  // Predicated region
  $region26: #{gpt_forward.12} parent=0 // pred_check
    %p25 = pneg %p24
  $region27: #{gpt_forward.12} parent=0 // pred_check_branch
    %27 = sbr.rel (%p25) target = $region29
  $region28: #{gpt_forward.12} parent=0 // pred_region
    %vm28 = vcmask 261120
    %29 = vst.msk [vmem:[#allocation2] sm:$0xff] %vm28, 0.0
    %30 = vst.msk [vmem:[#allocation2 + $0x8] sm:$0xff] %vm28, 0.0
  $region29: #{gpt_forward.12} parent=0 // pred_fallthru
    _
  %v31 = vld [vmem:[#allocation2] sm:$0xff]
  %v32 = vld [vmem:[#allocation2 + $0x8] sm:$0xff]
  %v33 = vld [vmem:[%s0] sm:$0xf]
  %v34 = vld [vmem:[%s0 + $0x4] sm:$0xf]
  %v35 = vld [vmem:[%s1] sm:$0xf]
  %v36 = vld [vmem:[%s1 + $0x4] sm:$0xf]
  %v37 = vld [vmem:[%s1 + $0x8] sm:$0xf]
  %v38 = vld [vmem:[%s1 + $0xc] sm:$0xf]
  %v41 = vunpack.c.l.b16 %v33
  %v42 = vunpack.c.l.b16 %v34
  %v43 = vpack.c.b16 %v42, %v41
  %v48 = vunpack.c.l.b16 %v35
  %v49 = vunpack.c.l.b16 %v36
  %v50 = vunpack.c.l.b16 %v37
  %v51 = vunpack.c.l.b16 %v38
  %v52 = vpack.c.b16 %v49, %v48
  %v53 = vpack.c.b16 %v51, %v50
  %vm56 = vcmask 261120
  %v58 = vsel %vm56, %v43, 0
  %60 = vmatprep.subr.bf16.mxu0 0
  %61 = vmatpush1.bf16.msra.mxu0 0
  %62 = vmatprep.subr.bf16.mxu0 0
  %63 = vmatpush1.bf16.msra.mxu0 0
  %64 = vmatprep.subr.bf16.mxu0 0
  %65 = vmatpush1.bf16.msra.mxu0 0
  %66 = vmatprep.subr.bf16.mxu0 0
  %67 = vmatpush1.bf16.msra.mxu0 0
  %68 = vmatprep.subr.bf16.mxu0 0
  %69 = vmatpush1.bf16.msra.mxu0 0
  %70 = vmatprep.subr.bf16.mxu0 0
  %71 = vmatpush1.bf16.msra.mxu0 0
  %72 = vmatprep.subr.bf16.mxu0 0
  %73 = vmatpush1.bf16.msra.mxu0 %v53
  %74 = vmatprep.subr.bf16.mxu0 0
  %75 = vmatpush1.bf16.msra.mxu0 %v52
  %76 = vmatprep.subr.bf16.mxu0 0
  %77 = vmatpush2.bf16.msra.mxu0 0
  %78 = vmatprep.subr.bf16.mxu0 0
  %79 = vmatpush2.bf16.msra.mxu0 0
  %80 = vmatprep.subr.bf16.mxu0 0
  %81 = vmatpush2.bf16.msra.mxu0 0
  %82 = vmatprep.subr.bf16.mxu0 0
  %83 = vmatpush2.bf16.msra.mxu0 0
  %84 = vmatprep.subr.bf16.mxu0 0
  %85 = vmatpush2.bf16.msra.mxu0 0
  %86 = vmatprep.subr.bf16.mxu0 0
  %87 = vmatpush2.bf16.msra.mxu0 0
  %88 = vmatprep.subr.bf16.mxu0 0
  %89 = vmatpush2.bf16.msra.mxu0 0
  %90 = vmatprep.subr.bf16.mxu0 0
  %91 = vmatpush2.bf16.msra.mxu0 0
  %92 = vmatprep.mubr.bf16.mxu0 0
  %93 = vmatmul.mubr.bf16.gmra.mxu0 %v58
  %v94 = vpop.f32.mrf.mxu0
  %v95 = vadd.f32 0.0, %v94
  %v96 = vpop.f32.mrf.mxu0
  %v97 = vpop.f32.mrf.mxu0
  %v98 = vadd.f32 0.0, %v97
  %v99 = vpop.f32.mrf.mxu0
  %100 = vdwg.mxu0
  %v101 = vadd.f32 %v31, %v95
  %v102 = vadd.f32 %v32, %v98
  %103 = vst.msk [vmem:[#allocation2] sm:$0xff] %vm56, %v101
  %104 = vst.msk [vmem:[#allocation2 + $0x8] sm:$0xff] %vm56, %v102
  // Predicated region
  $region30: #{gpt_forward.12} parent=0 // pred_check
    %p105 = pneg %p24
  $region31: #{gpt_forward.12} parent=0 // pred_check_branch
    %107 = sbr.rel (%p105) target = $region33
  $region32: #{gpt_forward.12} parent=0 // pred_region
    %v108 = vld [vmem:[#allocation2] sm:$0xff]
    %v109 = vld [vmem:[#allocation2 + $0x8] sm:$0xff]
    %v110 = vld [vmem:[%s2] sm:$0x1]
    %v112 = vlaneseq
    %v113 = vshrl.u32 %v112, 7
    %v114 = vsub.s32 0, %v113
    %v115 = vrot.slane %v110, %v114
    %v117 = vadd.f32 %v108, %v115
    %v118 = vadd.f32 %v109, %v115
    %v119 = vld [vmem:[%s3] sm:$0xf]
    %v120 = vld [vmem:[%s3 + $0x4] sm:$0xf]
    %v121 = vunpack.c.l.bf16 %v119
    %v122 = vunpack.c.l.bf16 %v120
    %v123 = vadd.f32 %v117, %v121
    %v124 = vadd.f32 %v118, %v122
    %v125 = vld [vmem:[%s4] sm:$0x1]
    %v126 = vld [vmem:[%s5] sm:$0x1]
    %v127 = vsel %vm56, %v123, 0.0
    %128 = vadd.xlane.f32.xlu0 %v127
    %v129 = vpop.xlane.xlu0 %128
    %v130 = vsel %vm56, %v124, 0.0
    %131 = vadd.xlane.f32.xlu0 %v130
    %v132 = vpop.xlane.xlu0 %131
    %v133 = vrcp.pop 32.0
    %v134 = vmul.f32 %v129, %v133
    %v135 = vmul.f32 %v132, %v133
    %v136 = vsub.f32 %v123, %v134
    %v137 = vsub.f32 %v124, %v135
    %v138 = vmul.f32 %v136, %v136
    %v139 = vmul.f32 %v137, %v137
    %v140 = vsel %vm56, %v138, 0.0
    %141 = vadd.xlane.f32.xlu0 %v140
    %v142 = vpop.xlane.xlu0 %141
    %v143 = vsel %vm56, %v139, 0.0
    %144 = vadd.xlane.f32.xlu0 %v143
    %v145 = vpop.xlane.xlu0 %144
    %v146 = vmul.f32 %v142, %v133
    %v147 = vmul.f32 %v145, %v133
    %v148 = vadd.f32 %v146, 1e-05
    %v149 = vadd.f32 %v147, 1e-05
    %v150 = vrsqrt.pop %v148
    %v151 = vrsqrt.pop %v149
    %v152 = vmul.f32 %v136, %v150
    %v153 = vmul.f32 %v137, %v151
    %v155 = vlaneseq
    %v156 = vshrl.u32 %v155, 7
    %v157 = vsub.s32 0, %v156
    %v158 = vrot.slane %v125, %v157
    %v160 = vmul.f32 %v152, %v158
    %v161 = vmul.f32 %v153, %v158
    %v163 = vlaneseq
    %v164 = vshrl.u32 %v163, 7
    %v165 = vsub.s32 0, %v164
    %v166 = vrot.slane %v126, %v165
    %v168 = vadd.f32 %v160, %v166
    %v169 = vadd.f32 %v161, %v166
    %v170 = vpack.c.bf16 %v169, %v168
    %v172 = vunpack.c.l.b16 %v170
    %v173 = vunpack.c.h.b16 %v170
    %v174 = vpack.c.b16 %v172, %v172
    %v175 = vpack.c.b16 %v173, %v173
    %vm178 = vcmask 257024
    %179 = vst.msk [vmem:[%s6] sm:$0xf] %vm178, %v174
    %180 = vst.msk [vmem:[%s6 + $0x4] sm:$0xf] %vm178, %v175
  $region33: #{gpt_forward.12} parent=0 // pred_fallthru
    _
  // Predicated region
  $region34: #{gpt_forward.12} parent=0 // pred_check
    _
  $region35: #{gpt_forward.12} parent=0 // pred_check_branch
    %182 = sbr.rel (0) target = $region37
  $region36: #{gpt_forward.12} parent=0 // pred_region
    _
  $region37: #{gpt_forward.12} parent=0 // pred_fallthru
    _
  // Predicated region
  $region38: #{gpt_forward.12} parent=0 // pred_check
    _
  $region39: #{gpt_forward.12} parent=0 // pred_check_branch
    %184 = sbr.rel (0) target = $region41
  $region40: #{gpt_forward.12} parent=0 // pred_region
    _
  $region41: #{gpt_forward.12} parent=0 // pred_fallthru
    _

// kernel: gpt_forward.11
$region0: #{gpt_forward.11}
  #allocation0 [shape = 'u32[]', space=smem, size = 0x4, offset = 0x4, fixed_abs, tag = 'smem constant byte address 0x4 - core index']
  #allocation1 [shape = 'u32[144,128]{1,0:T(1,128)}', space=vmem, size = 0x12000, scoped, tag = 'internal scratch']
  #allocation2 [shape = 'f32[4,8,1]{2,1,0:T(8,128)}', space=vmem, size = 0x4000, scoped, tag = 'scratch operand']
  #allocation3 [shape = 'f32[4,8,1]{2,1,0:T(8,128)}', space=vmem, size = 0x4000, scoped, tag = 'scratch operand']
  #allocation4 [shape = 'f32[4,8,8]{2,1,0:T(8,128)}', space=vmem, size = 0x4000, scoped, tag = 'scratch operand']
  %s0 = inlined_call_operand.vmem [shape: bf16[2,4,8,8], index: 0, kind: input, shape index: {}]
  %s1 = inlined_call_operand.vmem [shape: bf16[2,4,8,8], index: 1, kind: input, shape index: {}]
  %s2 = inlined_call_operand.vmem [shape: bf16[2,4,8,8], index: 2, kind: input, shape index: {}]
  %s3 = inlined_call_operand.vmem [shape: bf16[2,4,8,8], index: 3, kind: output, shape index: {}]
  %s4 = sld [smem:[#allocation0]]
  $region53: #{gpt_forward.11} parent=0
    _
  %s6 = ssub.s32 1, %s4
  %s7 = scalar_select 0, %s6, %s4
  loop: start=0, step=1, limit=4
  $region2: #{gpt_forward.11} parent=0 // loop_pre_header
    _
  $region3: #{gpt_forward.11} parent=0 // loop_header
    %s9 = sphi 0, %s13
    %p10 = scmp.ge.s32.totalorder %s9, 4
    %s16 = sphi 0, %s35
    %s17 = sphi 0, %s31
    %s18 = sphi 0, %s27
    %s19 = sphi 0, %s16
    %s20 = sphi 0, %s17
    %s21 = sphi 0, %s18
    %s22 = sphi 0, %s19
    %s23 = sphi 0, %s20
    %s24 = sphi 0, %s21
    %s40 = sphi 0, %s42
    %s43 = sphi 0, %s40
    %s44 = sphi 0, %s43
    %s60 = sphi 0, %s44
    %s68 = sphi 0, %s70
    %s71 = sphi 0, %s68
    %s72 = sphi 0, %s71
    %s88 = sphi 0, %s72
    %s96 = sphi 0, %s98
    %s99 = sphi 0, %s96
    %s100 = sphi 0, %s99
    %s116 = sphi 0, %s100
    %s124 = sphi 0, %s126
    %s127 = sphi 0, %s124
    %s128 = sphi 0, %s127
    %s144 = sphi 0, %s128
  $region4: #{gpt_forward.11} parent=0 // loop_header_branch
    %12 = sbr.rel (%p10) target = $region8
  $region5: #{gpt_forward.11} parent=0 // loop_body
    %s14 = ssub.s32 %s9, 1
    %s15 = ssub.s32 %s9, 2
    %s25 = sadd.s32 1, %s18
    %p26 = scmp.ge.s32.totalorder %s25, 1
    %s27 = scalar_select %p26, 0, %s25
    %s28 = sadd.s32 1, %s17
    %s29 = scalar_select %p26, %s28, %s17
    %p30 = scmp.ge.s32.totalorder %s29, 1
    %s31 = scalar_select %p30, 0, %s29
    %s32 = sadd.s32 1, %s16
    %s33 = scalar_select %p30, %s32, %s16
    %p34 = scmp.ge.s32.totalorder %s33, 2
    %s35 = scalar_select %p34, 0, %s33
    %s36 = ssub.s32 %s16, %s35
    %s37 = ssub.s32 %s17, %s31
    %s38 = sor.u32 %s36, %s37
    %p39 = scmp.eq.s32.totalorder %s38, 0
    %s41 = sadd.s32 %s40, 1
    %s42 = scalar_select %p39, %s40, %s41
    %p45 = pneg %p39
    %p46 = scmp.eq.s32.totalorder %s9, 1
    %p47 = por %p45, %p46
    %p48 = scmp.ne.s32.totalorder %s40, %s43
    %p49 = scmp.eq.s32.totalorder %s9, 0
    %p50 = por %p48, %p49
    %p51 = scmp.ne.s32.totalorder %s40, %s43
    %p52 = scmp.eq.s32.totalorder %s14, 1
    %p53 = por %p51, %p52
    %p54 = scmp.ne.s32.totalorder %s43, %s44
    %p55 = scmp.eq.s32.totalorder %s14, 0
    %p56 = por %p54, %p55
    %p57 = scmp.ne.s32.totalorder %s43, %s44
    %p58 = scmp.eq.s32.totalorder %s15, 1
    %p59 = por %p57, %p58
    %p61 = scmp.ne.s32.totalorder %s44, %s60
    %p62 = scmp.eq.s32.totalorder %s15, 0
    %p63 = por %p61, %p62
    %s64 = ssub.s32 %s16, %s35
    %s65 = ssub.s32 %s18, %s27
    %s66 = sor.u32 %s64, %s65
    %p67 = scmp.eq.s32.totalorder %s66, 0
    %s69 = sadd.s32 %s68, 1
    %s70 = scalar_select %p67, %s68, %s69
    %p73 = pneg %p67
    %p74 = scmp.eq.s32.totalorder %s9, 1
    %p75 = por %p73, %p74
    %p76 = scmp.ne.s32.totalorder %s68, %s71
    %p77 = scmp.eq.s32.totalorder %s9, 0
    %p78 = por %p76, %p77
    %p79 = scmp.ne.s32.totalorder %s68, %s71
    %p80 = scmp.eq.s32.totalorder %s14, 1
    %p81 = por %p79, %p80
    %p82 = scmp.ne.s32.totalorder %s71, %s72
    %p83 = scmp.eq.s32.totalorder %s14, 0
    %p84 = por %p82, %p83
    %p85 = scmp.ne.s32.totalorder %s71, %s72
    %p86 = scmp.eq.s32.totalorder %s15, 1
    %p87 = por %p85, %p86
    %p89 = scmp.ne.s32.totalorder %s72, %s88
    %p90 = scmp.eq.s32.totalorder %s15, 0
    %p91 = por %p89, %p90
    %s92 = ssub.s32 %s16, %s35
    %s93 = ssub.s32 %s18, %s27
    %s94 = sor.u32 %s92, %s93
    %p95 = scmp.eq.s32.totalorder %s94, 0
    %s97 = sadd.s32 %s96, 1
    %s98 = scalar_select %p95, %s96, %s97
    %p101 = pneg %p95
    %p102 = scmp.eq.s32.totalorder %s9, 1
    %p103 = por %p101, %p102
    %p104 = scmp.ne.s32.totalorder %s96, %s99
    %p105 = scmp.eq.s32.totalorder %s9, 0
    %p106 = por %p104, %p105
    %p107 = scmp.ne.s32.totalorder %s96, %s99
    %p108 = scmp.eq.s32.totalorder %s14, 1
    %p109 = por %p107, %p108
    %p110 = scmp.ne.s32.totalorder %s99, %s100
    %p111 = scmp.eq.s32.totalorder %s14, 0
    %p112 = por %p110, %p111
    %p113 = scmp.ne.s32.totalorder %s99, %s100
    %p114 = scmp.eq.s32.totalorder %s15, 1
    %p115 = por %p113, %p114
    %p117 = scmp.ne.s32.totalorder %s100, %s116
    %p118 = scmp.eq.s32.totalorder %s15, 0
    %p119 = por %p117, %p118
    %s120 = ssub.s32 %s16, %s35
    %s121 = ssub.s32 %s17, %s31
    %s122 = sor.u32 %s120, %s121
    %p123 = scmp.eq.s32.totalorder %s122, 0
    %s125 = sadd.s32 %s124, 1
    %s126 = scalar_select %p123, %s124, %s125
    %p129 = pneg %p123
    %p130 = scmp.eq.s32.totalorder %s9, 1
    %p131 = por %p129, %p130
    %p132 = scmp.ne.s32.totalorder %s124, %s127
    %p133 = scmp.eq.s32.totalorder %s9, 0
    %p134 = por %p132, %p133
    %p135 = scmp.ne.s32.totalorder %s124, %s127
    %p136 = scmp.eq.s32.totalorder %s14, 1
    %p137 = por %p135, %p136
    %p138 = scmp.ne.s32.totalorder %s127, %s128
    %p139 = scmp.eq.s32.totalorder %s14, 0
    %p140 = por %p138, %p139
    %p141 = scmp.ne.s32.totalorder %s127, %s128
    %p142 = scmp.eq.s32.totalorder %s15, 1
    %p143 = por %p141, %p142
    %p145 = scmp.ne.s32.totalorder %s128, %s144
    %p146 = scmp.eq.s32.totalorder %s15, 0
    %p147 = por %p145, %p146
    %p148 = scmp.le.s32.totalorder 1, %s9
    %p149 = scmp.lt.s32.totalorder %s9, 3
    %p150 = pnand %p148, %p149
    %p151 = pneg %p150
    // Predicated region
    $region9: #{gpt_forward.11} parent=5 // pred_check
      _
    $region10: #{gpt_forward.11} parent=5 // pred_check_branch
      %153 = sbr.rel (%p150) target = $region12
    $region11: #{gpt_forward.11} parent=5 // pred_region
      %s154 = ssub.s32 %s9, 1
    $region12: #{gpt_forward.11} parent=5 // pred_fallthru
      _
    %p155 = scmp.lt.s32.totalorder %s9, 2
    // Predicated region
    $region13: #{gpt_forward.11} parent=5 // pred_check
      %p156 = pneg %p155
    $region14: #{gpt_forward.11} parent=5 // pred_check_branch
      %158 = sbr.rel (%p156) target = $region16
    $region15: #{gpt_forward.11} parent=5 // pred_region
      // Predicated region
      $region17: #{gpt_forward.11} parent=15 // pred_check
        %p159 = pneg %p50
      $region18: #{gpt_forward.11} parent=15 // pred_check_branch
        %161 = sbr.rel (%p159) target = $region20
      $region19: #{gpt_forward.11} parent=15 // pred_region
        %p162 = scmp.lt.s32.totalorder %s16, 1
        %s163 = scalar_select %p162, %s16, 1
        %p164 = scmp.lt.s32.totalorder %s17, 0
        %s165 = scalar_select %p164, %s17, 0
        %s166 = smul.addr %s163, 4
        %s167 = sadd.s32 %s165, %s166
        %s168 = smul.addr %s167, 4
        %s169 = scalar_lea.vmem %s0, %s168
      $region20: #{gpt_forward.11} parent=15 // pred_fallthru
        _
      // Predicated region
      $region21: #{gpt_forward.11} parent=15 // pred_check
        %p170 = pneg %p78
      $region22: #{gpt_forward.11} parent=15 // pred_check_branch
        %172 = sbr.rel (%p170) target = $region24
      $region23: #{gpt_forward.11} parent=15 // pred_region
        %p173 = scmp.lt.s32.totalorder %s16, 1
        %s174 = scalar_select %p173, %s16, 1
        %p175 = scmp.lt.s32.totalorder %s18, 0
        %s176 = scalar_select %p175, %s18, 0
        %s177 = smul.addr %s174, 4
        %s178 = sadd.s32 %s176, %s177
        %s179 = smul.addr %s178, 4
        %s180 = scalar_lea.vmem %s1, %s179
      $region24: #{gpt_forward.11} parent=15 // pred_fallthru
        _
      // Predicated region
      $region25: #{gpt_forward.11} parent=15 // pred_check
        %p181 = pneg %p106
      $region26: #{gpt_forward.11} parent=15 // pred_check_branch
        %183 = sbr.rel (%p181) target = $region28
      $region27: #{gpt_forward.11} parent=15 // pred_region
        %p184 = scmp.lt.s32.totalorder %s16, 1
        %s185 = scalar_select %p184, %s16, 1
        %p186 = scmp.lt.s32.totalorder %s18, 0
        %s187 = scalar_select %p186, %s18, 0
        %s188 = smul.addr %s185, 4
        %s189 = sadd.s32 %s187, %s188
        %s190 = smul.addr %s189, 4
        %s191 = scalar_lea.vmem %s2, %s190
      $region28: #{gpt_forward.11} parent=15 // pred_fallthru
        _
    $region16: #{gpt_forward.11} parent=5 // pred_fallthru
      _
    %p192 = scmp.le.s32.totalorder 1, %s9
    %p193 = scmp.lt.s32.totalorder %s9, 3
    %p194 = pnand %p192, %p193
    %p195 = pneg %p194
    // Predicated region
    $region29: #{gpt_forward.11} parent=5 // pred_check
      _
    $region30: #{gpt_forward.11} parent=5 // pred_check_branch
      %197 = sbr.rel (%p194) target = $region32
    $region31: #{gpt_forward.11} parent=5 // pred_region
      %s198 = ssub.s32 %s9, 1
      %p199 = scmp.lt.s32.totalorder %s19, 1
      %s200 = scalar_select %p199, %s19, 1
      %p201 = scmp.lt.s32.totalorder %s20, 0
      %s202 = scalar_select %p201, %s20, 0
      %s203 = smul.addr %s200, 4
      %s204 = sadd.s32 %s202, %s203
      %s205 = smul.addr %s204, 4
      %s206 = scalar_lea.vmem %s0, %s205
      %p207 = pneg %p56
      %p208 = pneg %p53
      %p209 = scmp.lt.s32.totalorder %s19, 1
      %s210 = scalar_select %p209, %s19, 1
      %p211 = scmp.lt.s32.totalorder %s21, 0
      %s212 = scalar_select %p211, %s21, 0
      %s213 = smul.addr %s210, 4
      %s214 = sadd.s32 %s212, %s213
      %s215 = smul.addr %s214, 4
      %s216 = scalar_lea.vmem %s1, %s215
      %p217 = pneg %p84
      %p218 = pneg %p81
      %p219 = scmp.lt.s32.totalorder %s19, 1
      %s220 = scalar_select %p219, %s19, 1
      %p221 = scmp.lt.s32.totalorder %s21, 0
      %s222 = scalar_select %p221, %s21, 0
      %s223 = smul.addr %s220, 4
      %s224 = sadd.s32 %s222, %s223
      %s225 = smul.addr %s224, 4
      %s226 = scalar_lea.vmem %s2, %s225
      %p227 = pneg %p112
      %p228 = pneg %p109
      %p229 = pneg %p140
      %p230 = pneg %p137
      %p231 = scmp.lt.s32.totalorder %s19, 1
      %s232 = scalar_select %p231, %s19, 1
      %p233 = scmp.lt.s32.totalorder %s20, 0
      %s234 = scalar_select %p233, %s20, 0
      %s235 = smul.addr %s232, 4
      %s236 = sadd.s32 %s234, %s235
      %s237 = smul.addr %s236, 4
      %s238 = scalar_lea.vmem %s3, %s237
      %p239 = scmp.lt.s32.totalorder %s19, 1
      %s240 = scalar_select %p239, %s19, 1
      %p241 = scmp.lt.s32.totalorder %s20, 0
      %s242 = scalar_select %p241, %s20, 0
      %s243 = smul.addr %s240, 4
      %s244 = sadd.s32 %s242, %s243
      %s245 = smul.addr %s244, 4
      %s246 = scalar_lea.vmem %s0, %s245
      %p247 = scmp.lt.s32.totalorder %s19, 1
      %s248 = scalar_select %p247, %s19, 1
      %p249 = scmp.lt.s32.totalorder %s21, 0
      %s250 = scalar_select %p249, %s21, 0
      %s251 = smul.addr %s248, 4
      %s252 = sadd.s32 %s250, %s251
      %s253 = smul.addr %s252, 4
      %s254 = scalar_lea.vmem %s1, %s253
      %p255 = scmp.lt.s32.totalorder %s19, 1
      %s256 = scalar_select %p255, %s19, 1
      %p257 = scmp.lt.s32.totalorder %s21, 0
      %s258 = scalar_select %p257, %s21, 0
      %s259 = smul.addr %s256, 4
      %s260 = sadd.s32 %s258, %s259
      %s261 = smul.addr %s260, 4
      %s262 = scalar_lea.vmem %s2, %s261
      %p263 = scmp.lt.s32.totalorder %s19, 1
      %s264 = scalar_select %p263, %s19, 1
      %p265 = scmp.lt.s32.totalorder %s20, 0
      %s266 = scalar_select %p265, %s20, 0
      %s267 = smul.addr %s264, 4
      %s268 = sadd.s32 %s266, %s267
      %s269 = smul.addr %s268, 4
      %s270 = scalar_lea.vmem %s3, %s269
      %p272 = scmp.eq.s32.totalorder %s21, 0
      // Predicated region
      $region33: #{gpt_forward.11} parent=31 // pred_check
        %p273 = pneg %p272
      $region34: #{gpt_forward.11} parent=31 // pred_check_branch
        %275 = sbr.rel (%p273) target = $region36
      $region35: #{gpt_forward.11} parent=31 // pred_region
        %vm276 = vcmask 7168
        %277 = vst.msk [vmem:[#allocation2] sm:$0xff] %vm276, -inf
        %278 = vst.msk [vmem:[#allocation2 + $0x8] sm:$0xff] %vm276, -inf
        %279 = vst.msk [vmem:[#allocation2 + $0x10] sm:$0xff] %vm276, -inf
        %280 = vst.msk [vmem:[#allocation2 + $0x18] sm:$0xff] %vm276, -inf
        %281 = vst.msk [vmem:[#allocation3] sm:$0xff] %vm276, 0.0
        %282 = vst.msk [vmem:[#allocation3 + $0x8] sm:$0xff] %vm276, 0.0
        %283 = vst.msk [vmem:[#allocation3 + $0x10] sm:$0xff] %vm276, 0.0
        %284 = vst.msk [vmem:[#allocation3 + $0x18] sm:$0xff] %vm276, 0.0
        %vm285 = vcmask 64512
        %286 = vst.msk [vmem:[#allocation4] sm:$0xff] %vm285, 0.0
        %287 = vst.msk [vmem:[#allocation4 + $0x8] sm:$0xff] %vm285, 0.0
        %288 = vst.msk [vmem:[#allocation4 + $0x10] sm:$0xff] %vm285, 0.0
        %289 = vst.msk [vmem:[#allocation4 + $0x18] sm:$0xff] %vm285, 0.0
      $region36: #{gpt_forward.11} parent=31 // pred_fallthru
        _
      %v290 = vld [vmem:[%s246] sm:$0xf]
      %v291 = vld [vmem:[%s246 + $0x4] sm:$0xf]
      %v292 = vld [vmem:[%s246 + $0x8] sm:$0xf]
      %v293 = vld [vmem:[%s246 + $0xc] sm:$0xf]
      %v294 = vld [vmem:[%s254] sm:$0xf]
      %v295 = vld [vmem:[%s254 + $0x4] sm:$0xf]
      %v296 = vld [vmem:[%s254 + $0x8] sm:$0xf]
      %v297 = vld [vmem:[%s254 + $0xc] sm:$0xf]
      %v298 = vld [vmem:[%s262] sm:$0xf]
      %v299 = vld [vmem:[%s262 + $0x4] sm:$0xf]
      %v300 = vld [vmem:[%s262 + $0x8] sm:$0xf]
      %v301 = vld [vmem:[%s262 + $0xc] sm:$0xf]
      %vm302 = vcmask 64512
      %v304 = vsel %vm302, %v290, 0
      %v307 = vsel %vm302, %v294, 0
      %309 = vmatprep.subr.bf16.mxu0 0
      %310 = vmatpush1.bf16.xpose.msra.mxu0 0
      %311 = vmatprep.subr.bf16.mxu0 0
      %312 = vmatpush1.bf16.xpose.msra.mxu0 0
      %313 = vmatprep.subr.bf16.mxu0 0
      %314 = vmatpush1.bf16.xpose.msra.mxu0 0
      %315 = vmatprep.subr.bf16.mxu0 0
      %316 = vmatpush1.bf16.xpose.msra.mxu0 0
      %317 = vmatprep.subr.bf16.mxu0 0
      %318 = vmatpush1.bf16.xpose.msra.mxu0 0
      %319 = vmatprep.subr.bf16.mxu0 0
      %320 = vmatpush1.bf16.xpose.msra.mxu0 0
      %321 = vmatprep.subr.bf16.mxu0 0
      %322 = vmatpush1.bf16.xpose.msra.mxu0 0
      %323 = vmatprep.subr.bf16.mxu0 0
      %324 = vmatpush1.bf16.xpose.msra.mxu0 %v307
      %325 = vmatprep.subr.bf16.mxu0 0
      %326 = vmatpush2.bf16.xpose.msra.mxu0 0
      %327 = vmatprep.subr.bf16.mxu0 0
      %328 = vmatpush2.bf16.xpose.msra.mxu0 0
      %329 = vmatprep.subr.bf16.mxu0 0
      %330 = vmatpush2.bf16.xpose.msra.mxu0 0
      %331 = vmatprep.subr.bf16.mxu0 0
      %332 = vmatpush2.bf16.xpose.msra.mxu0 0
      %333 = vmatprep.subr.bf16.mxu0 0
      %334 = vmatpush2.bf16.xpose.msra.mxu0 0
      %335 = vmatprep.subr.bf16.mxu0 0
      %336 = vmatpush2.bf16.xpose.msra.mxu0 0
      %337 = vmatprep.subr.bf16.mxu0 0
      %338 = vmatpush2.bf16.xpose.msra.mxu0 0
      %339 = vmatprep.subr.bf16.mxu0 0
      %340 = vmatpush2.bf16.xpose.msra.mxu0 0
      %341 = vmatprep.mubr.bf16.mxu0 0
      %342 = vmatmul.mubr.bf16.gmra.mxu0 %v304
      %v343 = vpop.f32.mrf.mxu0
      %v344 = vadd.f32 0.0, %v343
      %v345 = vpop.f32.mrf.mxu0
      %v346 = vpop.f32.mrf.mxu0
      %v347 = vpop.f32.mrf.mxu0
      %348 = vdwg.mxu0
      %v350 = vsel %vm302, %v291, 0
      %v353 = vsel %vm302, %v295, 0
      %355 = vmatprep.subr.bf16.mxu0 0
      %356 = vmatpush1.bf16.xpose.msra.mxu0 0
      %357 = vmatprep.subr.bf16.mxu0 0
      %358 = vmatpush1.bf16.xpose.msra.mxu0 0
      %359 = vmatprep.subr.bf16.mxu0 0
      %360 = vmatpush1.bf16.xpose.msra.mxu0 0
      %361 = vmatprep.subr.bf16.mxu0 0
      %362 = vmatpush1.bf16.xpose.msra.mxu0 0
      %363 = vmatprep.subr.bf16.mxu0 0
      %364 = vmatpush1.bf16.xpose.msra.mxu0 0
      %365 = vmatprep.subr.bf16.mxu0 0
      %366 = vmatpush1.bf16.xpose.msra.mxu0 0
      %367 = vmatprep.subr.bf16.mxu0 0
      %368 = vmatpush1.bf16.xpose.msra.mxu0 0
      %369 = vmatprep.subr.bf16.mxu0 0
      %370 = vmatpush1.bf16.xpose.msra.mxu0 %v353
      %371 = vmatprep.subr.bf16.mxu0 0
      %372 = vmatpush2.bf16.xpose.msra.mxu0 0
      %373 = vmatprep.subr.bf16.mxu0 0
      %374 = vmatpush2.bf16.xpose.msra.mxu0 0
      %375 = vmatprep.subr.bf16.mxu0 0
      %376 = vmatpush2.bf16.xpose.msra.mxu0 0
      %377 = vmatprep.subr.bf16.mxu0 0
      %378 = vmatpush2.bf16.xpose.msra.mxu0 0
      %379 = vmatprep.subr.bf16.mxu0 0
      %380 = vmatpush2.bf16.xpose.msra.mxu0 0
      %381 = vmatprep.subr.bf16.mxu0 0
      %382 = vmatpush2.bf16.xpose.msra.mxu0 0
      %383 = vmatprep.subr.bf16.mxu0 0
      %384 = vmatpush2.bf16.xpose.msra.mxu0 0
      %385 = vmatprep.subr.bf16.mxu0 0
      %386 = vmatpush2.bf16.xpose.msra.mxu0 0
      %387 = vmatprep.mubr.bf16.mxu0 0
      %388 = vmatmul.mubr.bf16.gmra.mxu0 %v350
      %v389 = vpop.f32.mrf.mxu0
      %v390 = vadd.f32 0.0, %v389
      %v391 = vpop.f32.mrf.mxu0
      %v392 = vpop.f32.mrf.mxu0
      %v393 = vpop.f32.mrf.mxu0
      %394 = vdwg.mxu0
      %v396 = vsel %vm302, %v292, 0
      %v399 = vsel %vm302, %v296, 0
      %401 = vmatprep.subr.bf16.mxu0 0
      %402 = vmatpush1.bf16.xpose.msra.mxu0 0
      %403 = vmatprep.subr.bf16.mxu0 0
      %404 = vmatpush1.bf16.xpose.msra.mxu0 0
      %405 = vmatprep.subr.bf16.mxu0 0
      %406 = vmatpush1.bf16.xpose.msra.mxu0 0
      %407 = vmatprep.subr.bf16.mxu0 0
      %408 = vmatpush1.bf16.xpose.msra.mxu0 0
      %409 = vmatprep.subr.bf16.mxu0 0
      %410 = vmatpush1.bf16.xpose.msra.mxu0 0
      %411 = vmatprep.subr.bf16.mxu0 0
      %412 = vmatpush1.bf16.xpose.msra.mxu0 0
      %413 = vmatprep.subr.bf16.mxu0 0
      %414 = vmatpush1.bf16.xpose.msra.mxu0 0
      %415 = vmatprep.subr.bf16.mxu0 0
      %416 = vmatpush1.bf16.xpose.msra.mxu0 %v399
      %417 = vmatprep.subr.bf16.mxu0 0
      %418 = vmatpush2.bf16.xpose.msra.mxu0 0
      %419 = vmatprep.subr.bf16.mxu0 0
      %420 = vmatpush2.bf16.xpose.msra.mxu0 0
      %421 = vmatprep.subr.bf16.mxu0 0
      %422 = vmatpush2.bf16.xpose.msra.mxu0 0
      %423 = vmatprep.subr.bf16.mxu0 0
      %424 = vmatpush2.bf16.xpose.msra.mxu0 0
      %425 = vmatprep.subr.bf16.mxu0 0
      %426 = vmatpush2.bf16.xpose.msra.mxu0 0
      %427 = vmatprep.subr.bf16.mxu0 0
      %428 = vmatpush2.bf16.xpose.msra.mxu0 0
      %429 = vmatprep.subr.bf16.mxu0 0
      %430 = vmatpush2.bf16.xpose.msra.mxu0 0
      %431 = vmatprep.subr.bf16.mxu0 0
      %432 = vmatpush2.bf16.xpose.msra.mxu0 0
      %433 = vmatprep.mubr.bf16.mxu0 0
      %434 = vmatmul.mubr.bf16.gmra.mxu0 %v396
      %v435 = vpop.f32.mrf.mxu0
      %v436 = vadd.f32 0.0, %v435
      %v437 = vpop.f32.mrf.mxu0
      %v438 = vpop.f32.mrf.mxu0
      %v439 = vpop.f32.mrf.mxu0
      %440 = vdwg.mxu0
      %v442 = vsel %vm302, %v293, 0
      %v445 = vsel %vm302, %v297, 0
      %447 = vmatprep.subr.bf16.mxu0 0
      %448 = vmatpush1.bf16.xpose.msra.mxu0 0
      %449 = vmatprep.subr.bf16.mxu0 0
      %450 = vmatpush1.bf16.xpose.msra.mxu0 0
      %451 = vmatprep.subr.bf16.mxu0 0
      %452 = vmatpush1.bf16.xpose.msra.mxu0 0
      %453 = vmatprep.subr.bf16.mxu0 0
      %454 = vmatpush1.bf16.xpose.msra.mxu0 0
      %455 = vmatprep.subr.bf16.mxu0 0
      %456 = vmatpush1.bf16.xpose.msra.mxu0 0
      %457 = vmatprep.subr.bf16.mxu0 0
      %458 = vmatpush1.bf16.xpose.msra.mxu0 0
      %459 = vmatprep.subr.bf16.mxu0 0
      %460 = vmatpush1.bf16.xpose.msra.mxu0 0
      %461 = vmatprep.subr.bf16.mxu0 0
      %462 = vmatpush1.bf16.xpose.msra.mxu0 %v445
      %463 = vmatprep.subr.bf16.mxu0 0
      %464 = vmatpush2.bf16.xpose.msra.mxu0 0
      %465 = vmatprep.subr.bf16.mxu0 0
      %466 = vmatpush2.bf16.xpose.msra.mxu0 0
      %467 = vmatprep.subr.bf16.mxu0 0
      %468 = vmatpush2.bf16.xpose.msra.mxu0 0
      %469 = vmatprep.subr.bf16.mxu0 0
      %470 = vmatpush2.bf16.xpose.msra.mxu0 0
      %471 = vmatprep.subr.bf16.mxu0 0
      %472 = vmatpush2.bf16.xpose.msra.mxu0 0
      %473 = vmatprep.subr.bf16.mxu0 0
      %474 = vmatpush2.bf16.xpose.msra.mxu0 0
      %475 = vmatprep.subr.bf16.mxu0 0
      %476 = vmatpush2.bf16.xpose.msra.mxu0 0
      %477 = vmatprep.subr.bf16.mxu0 0
      %478 = vmatpush2.bf16.xpose.msra.mxu0 0
      %479 = vmatprep.mubr.bf16.mxu0 0
      %480 = vmatmul.mubr.bf16.gmra.mxu0 %v442
      %v481 = vpop.f32.mrf.mxu0
      %v482 = vadd.f32 0.0, %v481
      %v483 = vpop.f32.mrf.mxu0
      %v484 = vpop.f32.mrf.mxu0
      %v485 = vpop.f32.mrf.mxu0
      %486 = vdwg.mxu0
      %v487 = vmul.f32 %v344, 0.35355338
      %v488 = vmul.f32 %v390, 0.35355338
      %v489 = vmul.f32 %v436, 0.35355338
      %v490 = vmul.f32 %v482, 0.35355338
      %v491 = vld [vmem:[#allocation2] sm:$0xff]
      %v492 = vld [vmem:[#allocation2 + $0x8] sm:$0xff]
      %v493 = vld [vmem:[#allocation2 + $0x10] sm:$0xff]
      %v494 = vld [vmem:[#allocation2 + $0x18] sm:$0xff]
      %v495 = vsel %vm302, %v487, -inf
      %496 = vmax.xlane.f32.xlu0 %v495
      %v497 = vpop.xlane.xlu0 %496
      %v498 = vsel %vm302, %v488, -inf
      %499 = vmax.xlane.f32.xlu0 %v498
      %v500 = vpop.xlane.xlu0 %499
      %v501 = vsel %vm302, %v489, -inf
      %502 = vmax.xlane.f32.xlu0 %v501
      %v503 = vpop.xlane.xlu0 %502
      %v504 = vsel %vm302, %v490, -inf
      %505 = vmax.xlane.f32.xlu0 %v504
      %v506 = vpop.xlane.xlu0 %505
      %v507 = vmax.f32 %v491, %v497
      %v508 = vmax.f32 %v492, %v500
      %v509 = vmax.f32 %v493, %v503
      %v510 = vmax.f32 %v494, %v506
      %v511 = vsub.f32 %v491, %v507
      %v512 = vsub.f32 %v492, %v508
      %v513 = vsub.f32 %v493, %v509
      %v514 = vsub.f32 %v494, %v510
      %v515 = vmul.f32 %v511, 1.442695
      %v516 = vpow.pop %v515
      %v517 = vmul.f32 %v512, 1.442695
      %v518 = vpow.pop %v517
      %v519 = vmul.f32 %v513, 1.442695
      %v520 = vpow.pop %v519
      %v521 = vmul.f32 %v514, 1.442695
      %v522 = vpow.pop %v521
      %524 = vset.pattern.permute.xlu0 0
      %525 = vperm.xlu0 %524, %v507
      %v526 = vpop.permute.xlu0 %525
      %529 = vset.pattern.permute.xlu0 0
      %530 = vperm.xlu0 %529, %v508
      %v531 = vpop.permute.xlu0 %530
      %534 = vset.pattern.permute.xlu0 0
      %535 = vperm.xlu0 %534, %v509
      %v536 = vpop.permute.xlu0 %535
      %539 = vset.pattern.permute.xlu0 0
      %540 = vperm.xlu0 %539, %v510
      %v541 = vpop.permute.xlu0 %540
      %v543 = vsub.f32 %v487, %v526
      %v544 = vsub.f32 %v488, %v531
      %v545 = vsub.f32 %v489, %v536
      %v546 = vsub.f32 %v490, %v541
      %v547 = vmul.f32 %v543, 1.442695
      %v548 = vpow.pop %v547
      %v549 = vmul.f32 %v544, 1.442695
      %v550 = vpow.pop %v549
      %v551 = vmul.f32 %v545, 1.442695
      %v552 = vpow.pop %v551
      %v553 = vmul.f32 %v546, 1.442695
      %v554 = vpow.pop %v553
      %v555 = vld [vmem:[#allocation3] sm:$0xff]
      %v556 = vld [vmem:[#allocation3 + $0x8] sm:$0xff]
      %v557 = vld [vmem:[#allocation3 + $0x10] sm:$0xff]
      %v558 = vld [vmem:[#allocation3 + $0x18] sm:$0xff]
      %v559 = vmul.f32 %v516, %v555
      %v560 = vmul.f32 %v518, %v556
      %v561 = vmul.f32 %v520, %v557
      %v562 = vmul.f32 %v522, %v558
      %v563 = vsel %vm302, %v548, 0.0
      %564 = vadd.xlane.f32.xlu0 %v563
      %v565 = vpop.xlane.xlu0 %564
      %v566 = vsel %vm302, %v550, 0.0
      %567 = vadd.xlane.f32.xlu0 %v566
      %v568 = vpop.xlane.xlu0 %567
      %v569 = vsel %vm302, %v552, 0.0
      %570 = vadd.xlane.f32.xlu0 %v569
      %v571 = vpop.xlane.xlu0 %570
      %v572 = vsel %vm302, %v554, 0.0
      %573 = vadd.xlane.f32.xlu0 %v572
      %v574 = vpop.xlane.xlu0 %573
      %v575 = vadd.f32 %v559, %v565
      %v576 = vadd.f32 %v560, %v568
      %v577 = vadd.f32 %v561, %v571
      %v578 = vadd.f32 %v562, %v574
      %vm579 = vcmask 7168
      %580 = vst.msk [vmem:[#allocation3] sm:$0xff] %vm579, %v575
      %581 = vst.msk [vmem:[#allocation3 + $0x8] sm:$0xff] %vm579, %v576
      %582 = vst.msk [vmem:[#allocation3 + $0x10] sm:$0xff] %vm579, %v577
      %583 = vst.msk [vmem:[#allocation3 + $0x18] sm:$0xff] %vm579, %v578
      %v584 = vld [vmem:[#allocation4] sm:$0xff]
      %v585 = vld [vmem:[#allocation4 + $0x8] sm:$0xff]
      %v586 = vld [vmem:[#allocation4 + $0x10] sm:$0xff]
      %v587 = vld [vmem:[#allocation4 + $0x18] sm:$0xff]
      %589 = vset.pattern.permute.xlu0 0
      %590 = vperm.xlu0 %589, %v516
      %v591 = vpop.permute.xlu0 %590
      %594 = vset.pattern.permute.xlu0 0
      %595 = vperm.xlu0 %594, %v518
      %v596 = vpop.permute.xlu0 %595
      %599 = vset.pattern.permute.xlu0 0
      %600 = vperm.xlu0 %599, %v520
      %v601 = vpop.permute.xlu0 %600
      %604 = vset.pattern.permute.xlu0 0
      %605 = vperm.xlu0 %604, %v522
      %v606 = vpop.permute.xlu0 %605
      %v608 = vmul.f32 %v591, %v584
      %v609 = vmul.f32 %v596, %v585
      %v610 = vmul.f32 %v601, %v586
      %v611 = vmul.f32 %v606, %v587
      %v612 = vpack.c.bf16 %v548, %v548
      %v613 = vpack.c.bf16 %v550, %v550
      %v614 = vpack.c.bf16 %v552, %v552
      %v615 = vpack.c.bf16 %v554, %v554
      %v617 = vsel %vm302, %v612, 0
      %vm619 = vcmask 1043456
      %v621 = vsel %vm619, %v298, 0
      %623 = vmatprep.subr.bf16.mxu0 0
      %624 = vmatpush1.bf16.msra.mxu0 0
      %625 = vmatprep.subr.bf16.mxu0 0
      %626 = vmatpush1.bf16.msra.mxu0 0
      %627 = vmatprep.subr.bf16.mxu0 0
      %628 = vmatpush1.bf16.msra.mxu0 0
      %629 = vmatprep.subr.bf16.mxu0 0
      %630 = vmatpush1.bf16.msra.mxu0 0
      %631 = vmatprep.subr.bf16.mxu0 0
      %632 = vmatpush1.bf16.msra.mxu0 0
      %633 = vmatprep.subr.bf16.mxu0 0
      %634 = vmatpush1.bf16.msra.mxu0 0
      %635 = vmatprep.subr.bf16.mxu0 0
      %636 = vmatpush1.bf16.msra.mxu0 0
      %637 = vmatprep.subr.bf16.mxu0 0
      %638 = vmatpush1.bf16.msra.mxu0 %v621
      %639 = vmatprep.subr.bf16.mxu0 0
      %640 = vmatpush2.bf16.msra.mxu0 0
      %641 = vmatprep.subr.bf16.mxu0 0
      %642 = vmatpush2.bf16.msra.mxu0 0
      %643 = vmatprep.subr.bf16.mxu0 0
      %644 = vmatpush2.bf16.msra.mxu0 0
      %645 = vmatprep.subr.bf16.mxu0 0
      %646 = vmatpush2.bf16.msra.mxu0 0
      %647 = vmatprep.subr.bf16.mxu0 0
      %648 = vmatpush2.bf16.msra.mxu0 0
      %649 = vmatprep.subr.bf16.mxu0 0
      %650 = vmatpush2.bf16.msra.mxu0 0
      %651 = vmatprep.subr.bf16.mxu0 0
      %652 = vmatpush2.bf16.msra.mxu0 0
      %653 = vmatprep.subr.bf16.mxu0 0
      %654 = vmatpush2.bf16.msra.mxu0 0
      %655 = vmatprep.mubr.bf16.mxu0 0
      %656 = vmatmul.mubr.bf16.gmra.mxu0 %v617
      %v657 = vpop.f32.mrf.mxu0
      %v658 = vadd.f32 0.0, %v657
      %v659 = vpop.f32.mrf.mxu0
      %v660 = vpop.f32.mrf.mxu0
      %v661 = vpop.f32.mrf.mxu0
      %662 = vdwg.mxu0
      %v664 = vsel %vm302, %v613, 0
      %v667 = vsel %vm619, %v299, 0
      %669 = vmatprep.subr.bf16.mxu0 0
      %670 = vmatpush1.bf16.msra.mxu0 0
      %671 = vmatprep.subr.bf16.mxu0 0
      %672 = vmatpush1.bf16.msra.mxu0 0
      %673 = vmatprep.subr.bf16.mxu0 0
      %674 = vmatpush1.bf16.msra.mxu0 0
      %675 = vmatprep.subr.bf16.mxu0 0
      %676 = vmatpush1.bf16.msra.mxu0 0
      %677 = vmatprep.subr.bf16.mxu0 0
      %678 = vmatpush1.bf16.msra.mxu0 0
      %679 = vmatprep.subr.bf16.mxu0 0
      %680 = vmatpush1.bf16.msra.mxu0 0
      %681 = vmatprep.subr.bf16.mxu0 0
      %682 = vmatpush1.bf16.msra.mxu0 0
      %683 = vmatprep.subr.bf16.mxu0 0
      %684 = vmatpush1.bf16.msra.mxu0 %v667
      %685 = vmatprep.subr.bf16.mxu0 0
      %686 = vmatpush2.bf16.msra.mxu0 0
      %687 = vmatprep.subr.bf16.mxu0 0
      %688 = vmatpush2.bf16.msra.mxu0 0
      %689 = vmatprep.subr.bf16.mxu0 0
      %690 = vmatpush2.bf16.msra.mxu0 0
      %691 = vmatprep.subr.bf16.mxu0 0
      %692 = vmatpush2.bf16.msra.mxu0 0
      %693 = vmatprep.subr.bf16.mxu0 0
      %694 = vmatpush2.bf16.msra.mxu0 0
      %695 = vmatprep.subr.bf16.mxu0 0
      %696 = vmatpush2.bf16.msra.mxu0 0
      %697 = vmatprep.subr.bf16.mxu0 0
      %698 = vmatpush2.bf16.msra.mxu0 0
      %699 = vmatprep.subr.bf16.mxu0 0
      %700 = vmatpush2.bf16.msra.mxu0 0
      %701 = vmatprep.mubr.bf16.mxu0 0
      %702 = vmatmul.mubr.bf16.gmra.mxu0 %v664
      %v703 = vpop.f32.mrf.mxu0
      %v704 = vadd.f32 0.0, %v703
      %v705 = vpop.f32.mrf.mxu0
      %v706 = vpop.f32.mrf.mxu0
      %v707 = vpop.f32.mrf.mxu0
      %708 = vdwg.mxu0
      %v710 = vsel %vm302, %v614, 0
      %v713 = vsel %vm619, %v300, 0
      %715 = vmatprep.subr.bf16.mxu0 0
      %716 = vmatpush1.bf16.msra.mxu0 0
      %717 = vmatprep.subr.bf16.mxu0 0
      %718 = vmatpush1.bf16.msra.mxu0 0
      %719 = vmatprep.subr.bf16.mxu0 0
      %720 = vmatpush1.bf16.msra.mxu0 0
      %721 = vmatprep.subr.bf16.mxu0 0
      %722 = vmatpush1.bf16.msra.mxu0 0
      %723 = vmatprep.subr.bf16.mxu0 0
      %724 = vmatpush1.bf16.msra.mxu0 0
      %725 = vmatprep.subr.bf16.mxu0 0
      %726 = vmatpush1.bf16.msra.mxu0 0
      %727 = vmatprep.subr.bf16.mxu0 0
      %728 = vmatpush1.bf16.msra.mxu0 0
      %729 = vmatprep.subr.bf16.mxu0 0
      %730 = vmatpush1.bf16.msra.mxu0 %v713
      %731 = vmatprep.subr.bf16.mxu0 0
      %732 = vmatpush2.bf16.msra.mxu0 0
      %733 = vmatprep.subr.bf16.mxu0 0
      %734 = vmatpush2.bf16.msra.mxu0 0
      %735 = vmatprep.subr.bf16.mxu0 0
      %736 = vmatpush2.bf16.msra.mxu0 0
      %737 = vmatprep.subr.bf16.mxu0 0
      %738 = vmatpush2.bf16.msra.mxu0 0
      %739 = vmatprep.subr.bf16.mxu0 0
      %740 = vmatpush2.bf16.msra.mxu0 0
      %741 = vmatprep.subr.bf16.mxu0 0
      %742 = vmatpush2.bf16.msra.mxu0 0
      %743 = vmatprep.subr.bf16.mxu0 0
      %744 = vmatpush2.bf16.msra.mxu0 0
      %745 = vmatprep.subr.bf16.mxu0 0
      %746 = vmatpush2.bf16.msra.mxu0 0
      %747 = vmatprep.mubr.bf16.mxu0 0
      %748 = vmatmul.mubr.bf16.gmra.mxu0 %v710
      %v749 = vpop.f32.mrf.mxu0
      %v750 = vadd.f32 0.0, %v749
      %v751 = vpop.f32.mrf.mxu0
      %v752 = vpop.f32.mrf.mxu0
      %v753 = vpop.f32.mrf.mxu0
      %754 = vdwg.mxu0
      %v756 = vsel %vm302, %v615, 0
      %v759 = vsel %vm619, %v301, 0
      %761 = vmatprep.subr.bf16.mxu0 0
      %762 = vmatpush1.bf16.msra.mxu0 0
      %763 = vmatprep.subr.bf16.mxu0 0
      %764 = vmatpush1.bf16.msra.mxu0 0
      %765 = vmatprep.subr.bf16.mxu0 0
      %766 = vmatpush1.bf16.msra.mxu0 0
      %767 = vmatprep.subr.bf16.mxu0 0
      %768 = vmatpush1.bf16.msra.mxu0 0
      %769 = vmatprep.subr.bf16.mxu0 0
      %770 = vmatpush1.bf16.msra.mxu0 0
      %771 = vmatprep.subr.bf16.mxu0 0
      %772 = vmatpush1.bf16.msra.mxu0 0
      %773 = vmatprep.subr.bf16.mxu0 0
      %774 = vmatpush1.bf16.msra.mxu0 0
      %775 = vmatprep.subr.bf16.mxu0 0
      %776 = vmatpush1.bf16.msra.mxu0 %v759
      %777 = vmatprep.subr.bf16.mxu0 0
      %778 = vmatpush2.bf16.msra.mxu0 0
      %779 = vmatprep.subr.bf16.mxu0 0
      %780 = vmatpush2.bf16.msra.mxu0 0
      %781 = vmatprep.subr.bf16.mxu0 0
      %782 = vmatpush2.bf16.msra.mxu0 0
      %783 = vmatprep.subr.bf16.mxu0 0
      %784 = vmatpush2.bf16.msra.mxu0 0
      %785 = vmatprep.subr.bf16.mxu0 0
      %786 = vmatpush2.bf16.msra.mxu0 0
      %787 = vmatprep.subr.bf16.mxu0 0
      %788 = vmatpush2.bf16.msra.mxu0 0
      %789 = vmatprep.subr.bf16.mxu0 0
      %790 = vmatpush2.bf16.msra.mxu0 0
      %791 = vmatprep.subr.bf16.mxu0 0
      %792 = vmatpush2.bf16.msra.mxu0 0
      %793 = vmatprep.mubr.bf16.mxu0 0
      %794 = vmatmul.mubr.bf16.gmra.mxu0 %v756
      %v795 = vpop.f32.mrf.mxu0
      %v796 = vadd.f32 0.0, %v795
      %v797 = vpop.f32.mrf.mxu0
      %v798 = vpop.f32.mrf.mxu0
      %v799 = vpop.f32.mrf.mxu0
      %800 = vdwg.mxu0
      %v801 = vadd.f32 %v608, %v658
      %v802 = vadd.f32 %v609, %v704
      %v803 = vadd.f32 %v610, %v750
      %v804 = vadd.f32 %v611, %v796
      %805 = vst.msk [vmem:[#allocation4] sm:$0xff] %vm302, %v801
      %806 = vst.msk [vmem:[#allocation4 + $0x8] sm:$0xff] %vm302, %v802
      %807 = vst.msk [vmem:[#allocation4 + $0x10] sm:$0xff] %vm302, %v803
      %808 = vst.msk [vmem:[#allocation4 + $0x18] sm:$0xff] %vm302, %v804
      %809 = vst.msk [vmem:[#allocation2] sm:$0xff] %vm579, %v507
      %810 = vst.msk [vmem:[#allocation2 + $0x8] sm:$0xff] %vm579, %v508
      %811 = vst.msk [vmem:[#allocation2 + $0x10] sm:$0xff] %vm579, %v509
      %812 = vst.msk [vmem:[#allocation2 + $0x18] sm:$0xff] %vm579, %v510
      // Predicated region
      $region37: #{gpt_forward.11} parent=31 // pred_check
        %p813 = pneg %p272
      $region38: #{gpt_forward.11} parent=31 // pred_check_branch
        %815 = sbr.rel (%p813) target = $region40
      $region39: #{gpt_forward.11} parent=31 // pred_region
        %v816 = vld [vmem:[#allocation3] sm:$0xff]
        %v817 = vld [vmem:[#allocation3 + $0x8] sm:$0xff]
        %v818 = vld [vmem:[#allocation3 + $0x10] sm:$0xff]
        %v819 = vld [vmem:[#allocation3 + $0x18] sm:$0xff]
        %v820 = vrcp.pop %v816
        %v821 = vrcp.pop %v817
        %v822 = vrcp.pop %v818
        %v823 = vrcp.pop %v819
        %v824 = vld [vmem:[#allocation4] sm:$0xff]
        %v825 = vld [vmem:[#allocation4 + $0x8] sm:$0xff]
        %v826 = vld [vmem:[#allocation4 + $0x10] sm:$0xff]
        %v827 = vld [vmem:[#allocation4 + $0x18] sm:$0xff]
        %829 = vset.pattern.permute.xlu0 0
        %830 = vperm.xlu0 %829, %v820
        %v831 = vpop.permute.xlu0 %830
        %834 = vset.pattern.permute.xlu0 0
        %835 = vperm.xlu0 %834, %v821
        %v836 = vpop.permute.xlu0 %835
        %839 = vset.pattern.permute.xlu0 0
        %840 = vperm.xlu0 %839, %v822
        %v841 = vpop.permute.xlu0 %840
        %844 = vset.pattern.permute.xlu0 0
        %845 = vperm.xlu0 %844, %v823
        %v846 = vpop.permute.xlu0 %845
        %v848 = vmul.f32 %v824, %v831
        %v849 = vmul.f32 %v825, %v836
        %v850 = vmul.f32 %v826, %v841
        %v851 = vmul.f32 %v827, %v846
        %v852 = vpack.c.bf16 %v848, %v848
        %v853 = vpack.c.bf16 %v849, %v849
        %v854 = vpack.c.bf16 %v850, %v850
        %v855 = vpack.c.bf16 %v851, %v851
        %vm856 = vcmask 60416
        %857 = vst.msk [vmem:[%s270] sm:$0xf] %vm856, %v852
        %858 = vst.msk [vmem:[%s270 + $0x4] sm:$0xf] %vm856, %v853
        %859 = vst.msk [vmem:[%s270 + $0x8] sm:$0xf] %vm856, %v854
        %860 = vst.msk [vmem:[%s270 + $0xc] sm:$0xf] %vm856, %v855
      $region40: #{gpt_forward.11} parent=31 // pred_fallthru
        _
      %p861 = scmp.lt.s32.totalorder %s19, 1
      %s862 = scalar_select %p861, %s19, 1
      %p863 = scmp.lt.s32.totalorder %s20, 0
      %s864 = scalar_select %p863, %s20, 0
      %s865 = smul.addr %s862, 4
      %s866 = sadd.s32 %s864, %s865
      %s867 = smul.addr %s866, 4
      %s868 = scalar_lea.vmem %s3, %s867
      // Predicated region
      $region41: #{gpt_forward.11} parent=31 // pred_check
        %p869 = pneg %p137
      $region42: #{gpt_forward.11} parent=31 // pred_check_branch
        %871 = sbr.rel (%p869) target = $region44
      $region43: #{gpt_forward.11} parent=31 // pred_region
        _
      $region44: #{gpt_forward.11} parent=31 // pred_fallthru
        _
    $region32: #{gpt_forward.11} parent=5 // pred_fallthru
      _
    %p872 = scmp.le.s32.totalorder 2, %s9
    // Predicated region
    $region45: #{gpt_forward.11} parent=5 // pred_check
      %p873 = pneg %p872
    $region46: #{gpt_forward.11} parent=5 // pred_check_branch
      %875 = sbr.rel (%p873) target = $region48
    $region47: #{gpt_forward.11} parent=5 // pred_region
      %s876 = ssub.s32 %s9, 2
      // Predicated region
      $region49: #{gpt_forward.11} parent=47 // pred_check
        %p877 = pneg %p143
      $region50: #{gpt_forward.11} parent=47 // pred_check_branch
        %879 = sbr.rel (%p877) target = $region52
      $region51: #{gpt_forward.11} parent=47 // pred_region
        %p880 = scmp.lt.s32.totalorder %s22, 1
        %s881 = scalar_select %p880, %s22, 1
        %p882 = scmp.lt.s32.totalorder %s23, 0
        %s883 = scalar_select %p882, %s23, 0
        %s884 = smul.addr %s881, 4
        %s885 = sadd.s32 %s883, %s884
        %s886 = smul.addr %s885, 4
        %s887 = scalar_lea.vmem %s3, %s886
      $region52: #{gpt_forward.11} parent=47 // pred_fallthru
        _
    $region48: #{gpt_forward.11} parent=5 // pred_fallthru
      _
  $region6: #{gpt_forward.11} parent=0 // loop_footer
    %s13 = sadd.s32 1, %s9
  $region7: #{gpt_forward.11} parent=0 // loop_footer_branch
    %8 = sbr.rel target = $region3
  $region8: #{gpt_forward.11} parent=0 // loop_exit
    _

// kernel: gpt_forward.13
$region0: #{gpt_forward.13}
  #allocation0 [shape = 'u32[]', space=smem, size = 0x4, offset = 0x4, fixed_abs, tag = 'smem constant byte address 0x4 - core index']
  #allocation1 [shape = 'u32[144,128]{1,0:T(1,128)}', space=vmem, size = 0x12000, scoped, tag = 'internal scratch']
  #allocation2 [shape = 'f32[16,32]{1,0:T(8,128)}', space=vmem, size = 0x2000, scoped, tag = 'scratch operand']
  %s0 = inlined_call_operand.vmem [shape: bf16[16,32], index: 0, kind: input, shape index: {}]
  %s1 = inlined_call_operand.vmem [shape: bf16[32,128], index: 1, kind: input, shape index: {}]
  %s2 = inlined_call_operand.vmem [shape: f32[1,128], index: 2, kind: input, shape index: {}]
  %s3 = inlined_call_operand.vmem [shape: bf16[128,32], index: 3, kind: input, shape index: {}]
  %s4 = inlined_call_operand.vmem [shape: f32[1,32], index: 4, kind: input, shape index: {}]
  %s5 = inlined_call_operand.vmem [shape: f32[1,32], index: 5, kind: input, shape index: {}]
  %s6 = inlined_call_operand.vmem [shape: f32[1,32], index: 6, kind: input, shape index: {}]
  %s7 = inlined_call_operand.vmem [shape: bf16[16,32], index: 7, kind: output, shape index: {}]
  %s8 = sld [smem:[#allocation0]]
  $region46: #{gpt_forward.13} parent=0
    _
  %s10 = ssub.s32 1, %s8
  %s11 = scalar_select 0, %s10, %s8
  // Predicated region
  $region2: #{gpt_forward.13} parent=0 // pred_check
    _
  $region3: #{gpt_forward.13} parent=0 // pred_check_branch
    %13 = sbr.rel (0) target = $region5
  $region4: #{gpt_forward.13} parent=0 // pred_region
    _
  $region5: #{gpt_forward.13} parent=0 // pred_fallthru
    _
  // Predicated region
  $region6: #{gpt_forward.13} parent=0 // pred_check
    _
  $region7: #{gpt_forward.13} parent=0 // pred_check_branch
    %15 = sbr.rel (0) target = $region9
  $region8: #{gpt_forward.13} parent=0 // pred_region
    _
  $region9: #{gpt_forward.13} parent=0 // pred_fallthru
    _
  // Predicated region
  $region10: #{gpt_forward.13} parent=0 // pred_check
    _
  $region11: #{gpt_forward.13} parent=0 // pred_check_branch
    %17 = sbr.rel (0) target = $region13
  $region12: #{gpt_forward.13} parent=0 // pred_region
    _
  $region13: #{gpt_forward.13} parent=0 // pred_fallthru
    _
  // Predicated region
  $region14: #{gpt_forward.13} parent=0 // pred_check
    _
  $region15: #{gpt_forward.13} parent=0 // pred_check_branch
    %19 = sbr.rel (0) target = $region17
  $region16: #{gpt_forward.13} parent=0 // pred_region
    _
  $region17: #{gpt_forward.13} parent=0 // pred_fallthru
    _
  // Predicated region
  $region18: #{gpt_forward.13} parent=0 // pred_check
    _
  $region19: #{gpt_forward.13} parent=0 // pred_check_branch
    %21 = sbr.rel (0) target = $region21
  $region20: #{gpt_forward.13} parent=0 // pred_region
    _
  $region21: #{gpt_forward.13} parent=0 // pred_fallthru
    _
  // Predicated region
  $region22: #{gpt_forward.13} parent=0 // pred_check
    _
  $region23: #{gpt_forward.13} parent=0 // pred_check_branch
    %23 = sbr.rel (0) target = $region25
  $region24: #{gpt_forward.13} parent=0 // pred_region
    _
  $region25: #{gpt_forward.13} parent=0 // pred_fallthru
    _
  // Predicated region
  $region26: #{gpt_forward.13} parent=0 // pred_check
    _
  $region27: #{gpt_forward.13} parent=0 // pred_check_branch
    %25 = sbr.rel (0) target = $region29
  $region28: #{gpt_forward.13} parent=0 // pred_region
    _
  $region29: #{gpt_forward.13} parent=0 // pred_fallthru
    _
  %p27 = scmp.eq.s32.totalorder 0, 0
  // Predicated region
  $region30: #{gpt_forward.13} parent=0 // pred_check
    %p28 = pneg %p27
  $region31: #{gpt_forward.13} parent=0 // pred_check_branch
    %30 = sbr.rel (%p28) target = $region33
  $region32: #{gpt_forward.13} parent=0 // pred_region
    %vm31 = vcmask 261120
    %32 = vst.msk [vmem:[#allocation2] sm:$0xff] %vm31, 0.0
    %33 = vst.msk [vmem:[#allocation2 + $0x8] sm:$0xff] %vm31, 0.0
  $region33: #{gpt_forward.13} parent=0 // pred_fallthru
    _
  %v34 = vld [vmem:[%s0] sm:$0xf]
  %v35 = vld [vmem:[%s0 + $0x4] sm:$0xf]
  %v36 = vld [vmem:[%s1] sm:$0xf]
  %v37 = vld [vmem:[%s1 + $0x4] sm:$0xf]
  %v38 = vld [vmem:[%s1 + $0x8] sm:$0xf]
  %v39 = vld [vmem:[%s1 + $0xc] sm:$0xf]
  %v40 = vld [vmem:[%s2] sm:$0x1]
  %v42 = vlaneseq
  %v43 = vshrl.u32 %v42, 7
  %v44 = vsub.s32 0, %v43
  %v45 = vrot.slane %v40, %v44
  %v49 = vunpack.c.l.b16 %v34
  %v50 = vunpack.c.l.b16 %v35
  %v51 = vpack.c.b16 %v50, %v49
  %v56 = vunpack.c.l.b16 %v36
  %v57 = vunpack.c.l.b16 %v37
  %v58 = vunpack.c.l.b16 %v38
  %v59 = vunpack.c.l.b16 %v39
  %v60 = vpack.c.b16 %v57, %v56
  %v61 = vpack.c.b16 %v59, %v58
  %vm64 = vcmask 261120
  %v66 = vsel %vm64, %v51, 0
  %68 = vmatprep.subr.bf16.mxu0 0
  %69 = vmatpush1.bf16.msra.mxu0 0
  %70 = vmatprep.subr.bf16.mxu0 0
  %71 = vmatpush1.bf16.msra.mxu0 0
  %72 = vmatprep.subr.bf16.mxu0 0
  %73 = vmatpush1.bf16.msra.mxu0 0
  %74 = vmatprep.subr.bf16.mxu0 0
  %75 = vmatpush1.bf16.msra.mxu0 0
  %76 = vmatprep.subr.bf16.mxu0 0
  %77 = vmatpush1.bf16.msra.mxu0 0
  %78 = vmatprep.subr.bf16.mxu0 0
  %79 = vmatpush1.bf16.msra.mxu0 0
  %80 = vmatprep.subr.bf16.mxu0 0
  %81 = vmatpush1.bf16.msra.mxu0 %v61
  %82 = vmatprep.subr.bf16.mxu0 0
  %83 = vmatpush1.bf16.msra.mxu0 %v60
  %84 = vmatprep.subr.bf16.mxu0 0
  %85 = vmatpush2.bf16.msra.mxu0 0
  %86 = vmatprep.subr.bf16.mxu0 0
  %87 = vmatpush2.bf16.msra.mxu0 0
  %88 = vmatprep.subr.bf16.mxu0 0
  %89 = vmatpush2.bf16.msra.mxu0 0
  %90 = vmatprep.subr.bf16.mxu0 0
  %91 = vmatpush2.bf16.msra.mxu0 0
  %92 = vmatprep.subr.bf16.mxu0 0
  %93 = vmatpush2.bf16.msra.mxu0 0
  %94 = vmatprep.subr.bf16.mxu0 0
  %95 = vmatpush2.bf16.msra.mxu0 0
  %96 = vmatprep.subr.bf16.mxu0 0
  %97 = vmatpush2.bf16.msra.mxu0 0
  %98 = vmatprep.subr.bf16.mxu0 0
  %99 = vmatpush2.bf16.msra.mxu0 0
  %100 = vmatprep.mubr.bf16.mxu0 0
  %101 = vmatmul.mubr.bf16.gmra.mxu0 %v66
  %v102 = vpop.f32.mrf.mxu0
  %v103 = vadd.f32 %v45, %v102
  %v104 = vpop.f32.mrf.mxu0
  %v105 = vpop.f32.mrf.mxu0
  %v106 = vadd.f32 %v45, %v105
  %v107 = vpop.f32.mrf.mxu0
  %108 = vdwg.mxu0
  %v109 = vmul.f32 %v103, 0.5
  %v110 = vmul.f32 %v106, 0.5
  %v111 = vmul.f32 %v103, 0.70710677
  %v112 = vmul.f32 %v106, 0.70710677
  %v113 = verf.f32.pop %v111
  %v114 = verf.f32.pop %v112
  %v115 = vadd.f32 %v113, 1.0
  %v116 = vadd.f32 %v114, 1.0
  %v117 = vmul.f32 %v109, %v115
  %v118 = vmul.f32 %v110, %v116
  %v119 = vld [vmem:[#allocation2] sm:$0xff]
  %v120 = vld [vmem:[#allocation2 + $0x8] sm:$0xff]
  %v121 = vpack.c.bf16 %v118, %v117
  %v122 = vld [vmem:[%s3] sm:$0xf]
  %v123 = vld [vmem:[%s3 + $0x4] sm:$0xf]
  %v124 = vld [vmem:[%s3 + $0x8] sm:$0xf]
  %v125 = vld [vmem:[%s3 + $0xc] sm:$0xf]
  %v126 = vld [vmem:[%s3 + $0x10] sm:$0xf]
  %v127 = vld [vmem:[%s3 + $0x14] sm:$0xf]
  %v128 = vld [vmem:[%s3 + $0x18] sm:$0xf]
  %v129 = vld [vmem:[%s3 + $0x1c] sm:$0xf]
  %v130 = vld [vmem:[%s3 + $0x20] sm:$0xf]
  %v131 = vld [vmem:[%s3 + $0x24] sm:$0xf]
  %v132 = vld [vmem:[%s3 + $0x28] sm:$0xf]
  %v133 = vld [vmem:[%s3 + $0x2c] sm:$0xf]
  %v134 = vld [vmem:[%s3 + $0x30] sm:$0xf]
  %v135 = vld [vmem:[%s3 + $0x34] sm:$0xf]
  %v136 = vld [vmem:[%s3 + $0x38] sm:$0xf]
  %v137 = vld [vmem:[%s3 + $0x3c] sm:$0xf]
  %v154 = vunpack.c.l.b16 %v122
  %v155 = vunpack.c.l.b16 %v123
  %v156 = vunpack.c.l.b16 %v124
  %v157 = vunpack.c.l.b16 %v125
  %v158 = vunpack.c.l.b16 %v126
  %v159 = vunpack.c.l.b16 %v127
  %v160 = vunpack.c.l.b16 %v128
  %v161 = vunpack.c.l.b16 %v129
  %v162 = vunpack.c.l.b16 %v130
  %v163 = vunpack.c.l.b16 %v131
  %v164 = vunpack.c.l.b16 %v132
  %v165 = vunpack.c.l.b16 %v133
  %v166 = vunpack.c.l.b16 %v134
  %v167 = vunpack.c.l.b16 %v135
  %v168 = vunpack.c.l.b16 %v136
  %v169 = vunpack.c.l.b16 %v137
  %v170 = vpack.c.b16 %v155, %v154
  %v171 = vpack.c.b16 %v157, %v156
  %v172 = vpack.c.b16 %v159, %v158
  %v173 = vpack.c.b16 %v161, %v160
  %v174 = vpack.c.b16 %v163, %v162
  %v175 = vpack.c.b16 %v165, %v164
  %v176 = vpack.c.b16 %v167, %v166
  %v177 = vpack.c.b16 %v169, %v168
  %186 = vmatprep.subr.bf16.mxu0 0
  %187 = vmatpush1.bf16.msra.mxu0 %v177
  %188 = vmatprep.subr.bf16.mxu0 0
  %189 = vmatpush1.bf16.msra.mxu0 %v176
  %190 = vmatprep.subr.bf16.mxu0 0
  %191 = vmatpush1.bf16.msra.mxu0 %v175
  %192 = vmatprep.subr.bf16.mxu0 0
  %193 = vmatpush1.bf16.msra.mxu0 %v174
  %194 = vmatprep.subr.bf16.mxu0 0
  %195 = vmatpush1.bf16.msra.mxu0 %v173
  %196 = vmatprep.subr.bf16.mxu0 0
  %197 = vmatpush1.bf16.msra.mxu0 %v172
  %198 = vmatprep.subr.bf16.mxu0 0
  %199 = vmatpush1.bf16.msra.mxu0 %v171
  %200 = vmatprep.subr.bf16.mxu0 0
  %201 = vmatpush1.bf16.msra.mxu0 %v170
  %202 = vmatprep.subr.bf16.mxu0 0
  %203 = vmatpush2.bf16.msra.mxu0 0
  %204 = vmatprep.subr.bf16.mxu0 0
  %205 = vmatpush2.bf16.msra.mxu0 0
  %206 = vmatprep.subr.bf16.mxu0 0
  %207 = vmatpush2.bf16.msra.mxu0 0
  %208 = vmatprep.subr.bf16.mxu0 0
  %209 = vmatpush2.bf16.msra.mxu0 0
  %210 = vmatprep.subr.bf16.mxu0 0
  %211 = vmatpush2.bf16.msra.mxu0 0
  %212 = vmatprep.subr.bf16.mxu0 0
  %213 = vmatpush2.bf16.msra.mxu0 0
  %214 = vmatprep.subr.bf16.mxu0 0
  %215 = vmatpush2.bf16.msra.mxu0 0
  %216 = vmatprep.subr.bf16.mxu0 0
  %217 = vmatpush2.bf16.msra.mxu0 0
  %218 = vmatprep.mubr.bf16.mxu0 0
  %219 = vmatmul.mubr.bf16.gmra.mxu0 %v121
  %v220 = vpop.f32.mrf.mxu0
  %v221 = vadd.f32 0.0, %v220
  %v222 = vpop.f32.mrf.mxu0
  %v223 = vpop.f32.mrf.mxu0
  %v224 = vadd.f32 0.0, %v223
  %v225 = vpop.f32.mrf.mxu0
  %226 = vdwg.mxu0
  %v227 = vadd.f32 %v119, %v221
  %v228 = vadd.f32 %v120, %v224
  %229 = vst.msk [vmem:[#allocation2] sm:$0xff] %vm64, %v227
  %230 = vst.msk [vmem:[#allocation2 + $0x8] sm:$0xff] %vm64, %v228
  // Predicated region
  $region34: #{gpt_forward.13} parent=0 // pred_check
    %p231 = pneg %p27
  $region35: #{gpt_forward.13} parent=0 // pred_check_branch
    %233 = sbr.rel (%p231) target = $region37
  $region36: #{gpt_forward.13} parent=0 // pred_region
    %v234 = vld [vmem:[#allocation2] sm:$0xff]
    %v235 = vld [vmem:[#allocation2 + $0x8] sm:$0xff]
    %v236 = vld [vmem:[%s4] sm:$0x1]
    %v238 = vlaneseq
    %v239 = vshrl.u32 %v238, 7
    %v240 = vsub.s32 0, %v239
    %v241 = vrot.slane %v236, %v240
    %v243 = vadd.f32 %v234, %v241
    %v244 = vadd.f32 %v235, %v241
    %v245 = vld [vmem:[%s0] sm:$0xf]
    %v246 = vld [vmem:[%s0 + $0x4] sm:$0xf]
    %v247 = vunpack.c.l.bf16 %v245
    %v248 = vunpack.c.l.bf16 %v246
    %v249 = vadd.f32 %v243, %v247
    %v250 = vadd.f32 %v244, %v248
    %v251 = vld [vmem:[%s5] sm:$0x1]
    %v252 = vld [vmem:[%s6] sm:$0x1]
    %v253 = vsel %vm64, %v249, 0.0
    %254 = vadd.xlane.f32.xlu0 %v253
    %v255 = vpop.xlane.xlu0 %254
    %v256 = vsel %vm64, %v250, 0.0
    %257 = vadd.xlane.f32.xlu0 %v256
    %v258 = vpop.xlane.xlu0 %257
    %v259 = vrcp.pop 32.0
    %v260 = vmul.f32 %v255, %v259
    %v261 = vmul.f32 %v258, %v259
    %v262 = vsub.f32 %v249, %v260
    %v263 = vsub.f32 %v250, %v261
    %v264 = vmul.f32 %v262, %v262
    %v265 = vmul.f32 %v263, %v263
    %v266 = vsel %vm64, %v264, 0.0
    %267 = vadd.xlane.f32.xlu0 %v266
    %v268 = vpop.xlane.xlu0 %267
    %v269 = vsel %vm64, %v265, 0.0
    %270 = vadd.xlane.f32.xlu0 %v269
    %v271 = vpop.xlane.xlu0 %270
    %v272 = vmul.f32 %v268, %v259
    %v273 = vmul.f32 %v271, %v259
    %v274 = vadd.f32 %v272, 1e-05
    %v275 = vadd.f32 %v273, 1e-05
    %v276 = vrsqrt.pop %v274
    %v277 = vrsqrt.pop %v275
    %v278 = vmul.f32 %v262, %v276
    %v279 = vmul.f32 %v263, %v277
    %v281 = vlaneseq
    %v282 = vshrl.u32 %v281, 7
    %v283 = vsub.s32 0, %v282
    %v284 = vrot.slane %v251, %v283
    %v286 = vmul.f32 %v278, %v284
    %v287 = vmul.f32 %v279, %v284
    %v289 = vlaneseq
    %v290 = vshrl.u32 %v289, 7
    %v291 = vsub.s32 0, %v290
    %v292 = vrot.slane %v252, %v291
    %v294 = vadd.f32 %v286, %v292
    %v295 = vadd.f32 %v287, %v292
    %v296 = vpack.c.bf16 %v295, %v294
    %v298 = vunpack.c.l.b16 %v296
    %v299 = vunpack.c.h.b16 %v296
    %v300 = vpack.c.b16 %v298, %v298
    %v301 = vpack.c.b16 %v299, %v299
    %vm304 = vcmask 257024
    %305 = vst.msk [vmem:[%s7] sm:$0xf] %vm304, %v300
    %306 = vst.msk [vmem:[%s7 + $0x4] sm:$0xf] %vm304, %v301
  $region37: #{gpt_forward.13} parent=0 // pred_fallthru
    _
  // Predicated region
  $region38: #{gpt_forward.13} parent=0 // pred_check
    _
  $region39: #{gpt_forward.13} parent=0 // pred_check_branch
    %308 = sbr.rel (0) target = $region41
  $region40: #{gpt_forward.13} parent=0 // pred_region
    _
  $region41: #{gpt_forward.13} parent=0 // pred_fallthru
    _
  // Predicated region
  $region42: #{gpt_forward.13} parent=0 // pred_check
    _
  $region43: #{gpt_forward.13} parent=0 // pred_check_branch
    %310 = sbr.rel (0) target = $region45
  $region44: #{gpt_forward.13} parent=0 // pred_region
    _
  $region45: #{gpt_forward.13} parent=0 // pred_fallthru
    _

// kernel: gpt_forward.18
$region0: #{gpt_forward.18}
  #allocation0 [shape = 'u32[]', space=smem, size = 0x4, offset = 0x4, fixed_abs, tag = 'smem constant byte address 0x4 - core index']
  #allocation1 [shape = 'u32[144,128]{1,0:T(1,128)}', space=vmem, size = 0x12000, scoped, tag = 'internal scratch']
  %s0 = inlined_call_operand.vmem [shape: bf16[16,32], index: 0, kind: input, shape index: {}]
  %s1 = inlined_call_operand.vmem [shape: f32[1,32], index: 1, kind: input, shape index: {}]
  %s2 = inlined_call_operand.vmem [shape: f32[1,32], index: 2, kind: input, shape index: {}]
  %s3 = inlined_call_operand.vmem [shape: bf16[16,32], index: 3, kind: output, shape index: {}]
  %s4 = sld [smem:[#allocation0]]
  $region22: #{gpt_forward.18} parent=0
    _
  %s6 = ssub.s32 1, %s4
  %s7 = scalar_select 0, %s6, %s4
  // Predicated region
  $region2: #{gpt_forward.18} parent=0 // pred_check
    _
  $region3: #{gpt_forward.18} parent=0 // pred_check_branch
    %9 = sbr.rel (0) target = $region5
  $region4: #{gpt_forward.18} parent=0 // pred_region
    _
  $region5: #{gpt_forward.18} parent=0 // pred_fallthru
    _
  // Predicated region
  $region6: #{gpt_forward.18} parent=0 // pred_check
    _
  $region7: #{gpt_forward.18} parent=0 // pred_check_branch
    %11 = sbr.rel (0) target = $region9
  $region8: #{gpt_forward.18} parent=0 // pred_region
    _
  $region9: #{gpt_forward.18} parent=0 // pred_fallthru
    _
  // Predicated region
  $region10: #{gpt_forward.18} parent=0 // pred_check
    _
  $region11: #{gpt_forward.18} parent=0 // pred_check_branch
    %13 = sbr.rel (0) target = $region13
  $region12: #{gpt_forward.18} parent=0 // pred_region
    _
  $region13: #{gpt_forward.18} parent=0 // pred_fallthru
    _
  %v14 = vld [vmem:[%s0] sm:$0xf]
  %v15 = vld [vmem:[%s0 + $0x4] sm:$0xf]
  %v16 = vunpack.c.l.bf16 %v14
  %v17 = vunpack.c.l.bf16 %v15
  %v18 = vld [vmem:[%s1] sm:$0x1]
  %v19 = vld [vmem:[%s2] sm:$0x1]
  %vm20 = vcmask 261120
  %v21 = vsel %vm20, %v16, 0.0
  %22 = vadd.xlane.f32.xlu0 %v21
  %v23 = vpop.xlane.xlu0 %22
  %v24 = vsel %vm20, %v17, 0.0
  %25 = vadd.xlane.f32.xlu0 %v24
  %v26 = vpop.xlane.xlu0 %25
  %v27 = vrcp.pop 32.0
  %v28 = vmul.f32 %v23, %v27
  %v29 = vmul.f32 %v26, %v27
  %v30 = vsub.f32 %v16, %v28
  %v31 = vsub.f32 %v17, %v29
  %v32 = vmul.f32 %v30, %v30
  %v33 = vmul.f32 %v31, %v31
  %v34 = vsel %vm20, %v32, 0.0
  %35 = vadd.xlane.f32.xlu0 %v34
  %v36 = vpop.xlane.xlu0 %35
  %v37 = vsel %vm20, %v33, 0.0
  %38 = vadd.xlane.f32.xlu0 %v37
  %v39 = vpop.xlane.xlu0 %38
  %v40 = vmul.f32 %v36, %v27
  %v41 = vmul.f32 %v39, %v27
  %v42 = vadd.f32 %v40, 1e-05
  %v43 = vadd.f32 %v41, 1e-05
  %v44 = vrsqrt.pop %v42
  %v45 = vrsqrt.pop %v43
  %v46 = vmul.f32 %v30, %v44
  %v47 = vmul.f32 %v31, %v45
  %v49 = vlaneseq
  %v50 = vshrl.u32 %v49, 7
  %v51 = vsub.s32 0, %v50
  %v52 = vrot.slane %v18, %v51
  %v54 = vmul.f32 %v46, %v52
  %v55 = vmul.f32 %v47, %v52
  %v57 = vlaneseq
  %v58 = vshrl.u32 %v57, 7
  %v59 = vsub.s32 0, %v58
  %v60 = vrot.slane %v19, %v59
  %v62 = vadd.f32 %v54, %v60
  %v63 = vadd.f32 %v55, %v60
  %v64 = vpack.c.bf16 %v63, %v62
  %v66 = vunpack.c.l.b16 %v64
  %v67 = vunpack.c.h.b16 %v64
  %v68 = vpack.c.b16 %v66, %v66
  %v69 = vpack.c.b16 %v67, %v67
  %vm72 = vcmask 257024
  %73 = vst.msk [vmem:[%s3] sm:$0xf] %vm72, %v68
  %74 = vst.msk [vmem:[%s3 + $0x4] sm:$0xf] %vm72, %v69
  // Predicated region
  $region14: #{gpt_forward.18} parent=0 // pred_check
    _
  $region15: #{gpt_forward.18} parent=0 // pred_check_branch
    %76 = sbr.rel (0) target = $region17
  $region16: #{gpt_forward.18} parent=0 // pred_region
    _
  $region17: #{gpt_forward.18} parent=0 // pred_fallthru
    _
  // Predicated region
  $region18: #{gpt_forward.18} parent=0 // pred_check
    _
  $region19: #{gpt_forward.18} parent=0 // pred_check_branch
    %78 = sbr.rel (0) target = $region21
  $region20: #{gpt_forward.18} parent=0 // pred_region
    _
  $region21: #{gpt_forward.18} parent=0 // pred_fallthru
    _

// kernel: gpt_forward.19
$region0: #{gpt_forward.19}
  #allocation0 [shape = 'u32[]', space=smem, size = 0x4, offset = 0x4, fixed_abs, tag = 'smem constant byte address 0x4 - core index']
  #allocation1 [shape = 'u32[144,128]{1,0:T(1,128)}', space=vmem, size = 0x12000, scoped, tag = 'internal scratch']
  #allocation2 [shape = 'f32[16,128]{1,0:T(8,128)}', space=vmem, size = 0x2000, scoped, tag = 'scratch operand']
  %s0 = inlined_call_operand.vmem [shape: bf16[16,32], index: 0, kind: input, shape index: {}]
  %s1 = inlined_call_operand.vmem [shape: bf16[32,128], index: 1, kind: input, shape index: {}]
  %s2 = inlined_call_operand.hbm [shape: bf16[16,128], index: 2, kind: output, shape index: {}]
  %s3 = sld [smem:[#allocation0]]
  $region26: #{gpt_forward.19} parent=0
    _
  %s5 = ssub.s32 1, %s3
  %s6 = scalar_select 0, %s5, %s3
  $region1: #{gpt_forward.19} parent=0
    #allocation3 [shape = 'u8[4096]{0}', space=vmem, size = 0x1000, scoped, tag = 'output window, operand 0, single buffered']
    #allocation4 [shape = 's32[1]{0}', space=sflag, size = 0x4, scoped, tag = 'scoped memory for gpt_forward.19']
    %7 = vsyncpa [#allocation4], 0
    // Predicated region
    $region2: #{gpt_forward.19} parent=1 // pred_check
      _
    $region3: #{gpt_forward.19} parent=1 // pred_check_branch
      %9 = sbr.rel (0) target = $region5
    $region4: #{gpt_forward.19} parent=1 // pred_region
      _
    $region5: #{gpt_forward.19} parent=1 // pred_fallthru
      _
    // Predicated region
    $region6: #{gpt_forward.19} parent=1 // pred_check
      _
    $region7: #{gpt_forward.19} parent=1 // pred_check_branch
      %11 = sbr.rel (0) target = $region9
    $region8: #{gpt_forward.19} parent=1 // pred_region
      _
    $region9: #{gpt_forward.19} parent=1 // pred_fallthru
      _
    %p13 = scmp.eq.s32.totalorder 0, 0
    // Predicated region
    $region10: #{gpt_forward.19} parent=1 // pred_check
      %p14 = pneg %p13
    $region11: #{gpt_forward.19} parent=1 // pred_check_branch
      %16 = sbr.rel (%p14) target = $region13
    $region12: #{gpt_forward.19} parent=1 // pred_region
      %17 = vst [vmem:[#allocation2] sm:$0xff] 0.0
      %18 = vst [vmem:[#allocation2 + $0x8] sm:$0xff] 0.0
    $region13: #{gpt_forward.19} parent=1 // pred_fallthru
      _
    %v19 = vld [vmem:[#allocation2] sm:$0xff]
    %v20 = vld [vmem:[#allocation2 + $0x8] sm:$0xff]
    %v21 = vld [vmem:[%s0] sm:$0xf]
    %v22 = vld [vmem:[%s0 + $0x4] sm:$0xf]
    %v23 = vld [vmem:[%s1] sm:$0xf]
    %v24 = vld [vmem:[%s1 + $0x4] sm:$0xf]
    %v25 = vld [vmem:[%s1 + $0x8] sm:$0xf]
    %v26 = vld [vmem:[%s1 + $0xc] sm:$0xf]
    %v29 = vunpack.c.l.b16 %v21
    %v30 = vunpack.c.l.b16 %v22
    %v31 = vpack.c.b16 %v30, %v29
    %v36 = vunpack.c.l.b16 %v23
    %v37 = vunpack.c.l.b16 %v24
    %v38 = vunpack.c.l.b16 %v25
    %v39 = vunpack.c.l.b16 %v26
    %v40 = vpack.c.b16 %v37, %v36
    %v41 = vpack.c.b16 %v39, %v38
    %vm44 = vcmask 261120
    %v46 = vsel %vm44, %v31, 0
    %48 = vmatprep.subr.bf16.mxu0 0
    %49 = vmatpush1.bf16.msra.mxu0 0
    %50 = vmatprep.subr.bf16.mxu0 0
    %51 = vmatpush1.bf16.msra.mxu0 0
    %52 = vmatprep.subr.bf16.mxu0 0
    %53 = vmatpush1.bf16.msra.mxu0 0
    %54 = vmatprep.subr.bf16.mxu0 0
    %55 = vmatpush1.bf16.msra.mxu0 0
    %56 = vmatprep.subr.bf16.mxu0 0
    %57 = vmatpush1.bf16.msra.mxu0 0
    %58 = vmatprep.subr.bf16.mxu0 0
    %59 = vmatpush1.bf16.msra.mxu0 0
    %60 = vmatprep.subr.bf16.mxu0 0
    %61 = vmatpush1.bf16.msra.mxu0 %v41
    %62 = vmatprep.subr.bf16.mxu0 0
    %63 = vmatpush1.bf16.msra.mxu0 %v40
    %64 = vmatprep.subr.bf16.mxu0 0
    %65 = vmatpush2.bf16.msra.mxu0 0
    %66 = vmatprep.subr.bf16.mxu0 0
    %67 = vmatpush2.bf16.msra.mxu0 0
    %68 = vmatprep.subr.bf16.mxu0 0
    %69 = vmatpush2.bf16.msra.mxu0 0
    %70 = vmatprep.subr.bf16.mxu0 0
    %71 = vmatpush2.bf16.msra.mxu0 0
    %72 = vmatprep.subr.bf16.mxu0 0
    %73 = vmatpush2.bf16.msra.mxu0 0
    %74 = vmatprep.subr.bf16.mxu0 0
    %75 = vmatpush2.bf16.msra.mxu0 0
    %76 = vmatprep.subr.bf16.mxu0 0
    %77 = vmatpush2.bf16.msra.mxu0 0
    %78 = vmatprep.subr.bf16.mxu0 0
    %79 = vmatpush2.bf16.msra.mxu0 0
    %80 = vmatprep.mubr.bf16.mxu0 0
    %81 = vmatmul.mubr.bf16.gmra.mxu0 %v46
    %v82 = vpop.f32.mrf.mxu0
    %v83 = vadd.f32 0.0, %v82
    %v84 = vpop.f32.mrf.mxu0
    %v85 = vpop.f32.mrf.mxu0
    %v86 = vadd.f32 0.0, %v85
    %v87 = vpop.f32.mrf.mxu0
    %88 = vdwg.mxu0
    %v89 = vadd.f32 %v19, %v83
    %v90 = vadd.f32 %v20, %v86
    %91 = vst [vmem:[#allocation2] sm:$0xff] %v89
    %92 = vst [vmem:[#allocation2 + $0x8] sm:$0xff] %v90
    // Predicated region
    $region14: #{gpt_forward.19} parent=1 // pred_check
      %p93 = pneg %p13
    $region15: #{gpt_forward.19} parent=1 // pred_check_branch
      %95 = sbr.rel (%p93) target = $region17
    $region16: #{gpt_forward.19} parent=1 // pred_region
      %v96 = vld [vmem:[#allocation2] sm:$0xff]
      %v97 = vld [vmem:[#allocation2 + $0x8] sm:$0xff]
      %v98 = vpack.c.bf16 %v97, %v96
      %v100 = vunpack.c.l.b16 %v98
      %v101 = vunpack.c.h.b16 %v98
      %v102 = vpack.c.b16 %v100, %v100
      %v103 = vpack.c.b16 %v101, %v101
      %106 = vst [vmem:[#allocation3] sm:$0xf] %v102
      %107 = vst [vmem:[#allocation3 + $0x4] sm:$0xf] %v103
    $region17: #{gpt_forward.19} parent=1 // pred_fallthru
      _
    // Predicated region
    $region18: #{gpt_forward.19} parent=1 // pred_check
      _
    $region19: #{gpt_forward.19} parent=1 // pred_check_branch
      %109 = sbr.rel (0) target = $region21
    $region20: #{gpt_forward.19} parent=1 // pred_region
      %s111 = ssub.s32 128, 128
      %112 = vsyncadd [#allocation4], %s111
      %s113 = sshll.u32 [#allocation3], 4
      %s114 = int_to_ptr.vmem [resolvable:$true] %s113
      %119 = dma.vmem_to_hbm [thread:$0]  %s114, 128, %s2, [#allocation4], 64, 64, 4
    $region21: #{gpt_forward.19} parent=1 // pred_fallthru
      _
    // Predicated region
    $region22: #{gpt_forward.19} parent=1 // pred_check
      _
    $region23: #{gpt_forward.19} parent=1 // pred_check_branch
      %121 = sbr.rel (0) target = $region25
    $region24: #{gpt_forward.19} parent=1 // pred_region
      %122 = dma.done [#allocation4], 128
    $region25: #{gpt_forward.19} parent=1 // pred_fallthru
      _
    %123 = vsyncpa [#allocation4], 1

</llo_original>
